<compile_context>
chip_gen: v7x
topology: tpu7x:2x2x1
jax: 0.10.0
libtpu: 0.0.40
codegen_flags: <defaults>
</compile_context>

<pallas_src>
import math

import jax
import jax.numpy as jnp
import numpy as np
from jax.experimental import pallas as pl
from jax.experimental.pallas import tpu as pltpu

# ---------------- model hyperparams (small, consistent with the module) -------
B = 2          # batch
S = 8          # seq_len
D = 32         # d_model
H = 4          # n_heads
DK = D // H    # head_dim
FF = 64        # ff_dim
EPS = 1e-5     # nn.LayerNorm default eps
NEG = -1000000000.0

# lane-vreg-aligned slots of Q/K/V inside the padded fused-QKV projection output
QOFF, KOFF, VOFF = 0, 128, 256
WQKV_W = 3 * 128   # padded width of the packed QKV weight
PW = 128           # width of the packed small-param rows (>= FF, lane-vreg aligned)


def decoder_layer_kernel(x_ref, mask_ref, wqkv_ref, wo_ref, w1_ref, w2_ref, pvec_ref,
                         out_ref, attn_ref):
    """Whole decoder layer, one invocation (no grid).

    x_ref    : [B, S, D]        input activations
    mask_ref : [B, S, S]        attention mask (1 = keep, 0 = masked) as float32
    wqkv_ref : [D, 3*128]       Wq | Wk | Wv, each in its own 128-lane slot (zero padded)
    wo_ref   : [D, D]
    w1_ref   : [D, FF]
    w2_ref   : [FF, D]
    pvec_ref : [16, PW]         packed small vectors (biases / LN params), zero padded
    out_ref  : [B, S, D]        layer output
    attn_ref : [B, H, S, S]     attention weights
    """
    x = x_ref[...].reshape(B * S, D)                   # merge leading dims (free)
    mask = mask_ref[...]                               # [B, S, S]

    # ---- packed small params (sublane slices, lane offset 0 -> free views) ----
    b_q  = pvec_ref[0:1, 0:D]
    b_k  = pvec_ref[1:2, 0:D]
    b_v  = pvec_ref[2:3, 0:D]
    b_o  = pvec_ref[3:4, 0:D]
    ln1g = pvec_ref[4:5, 0:D]
    ln1b = pvec_ref[5:6, 0:D]
    b_1  = pvec_ref[6:7, 0:FF]
    b_2  = pvec_ref[7:8, 0:D]
    ln2g = pvec_ref[8:9, 0:D]
    ln2b = pvec_ref[9:10, 0:D]

    # ---- fused QKV projection (single MXU push); slices at 128-lane boundaries ----
    qkv = jnp.dot(x, wqkv_ref[...], preferred_element_type=jnp.float32)   # [BS, 384]
    q = qkv[:, QOFF:QOFF + D] + b_q                    # [BS, D]
    k = qkv[:, KOFF:KOFF + D] + b_k
    v = qkv[:, VOFF:VOFF + D] + b_v

    def split_heads(t):                                # [BS, D] -> [B*H, S, DK]
        return t.reshape(B, S, H, DK).transpose(0, 2, 1, 3).reshape(B * H, S, DK)

    qh, kh, vh = split_heads(q), split_heads(k), split_heads(v)

    # ---- attention: single fused-batch (B*H) dot_general for scores and context ----
    scale = 1.0 / math.sqrt(DK)
    scores = jnp.einsum("nqd,nkd->nqk", qh, kh,
                        preferred_element_type=jnp.float32) * scale       # [B*H, S, S]
    maskn = jnp.broadcast_to(mask[:, None, :, :], (B, H, S, S)).reshape(B * H, S, S)
    scores = jnp.where(maskn == 0.0, NEG, scores)      # masked_fill semantics
    scores = scores - jnp.max(scores, axis=-1, keepdims=True)
    e = jnp.exp(scores)
    w = e / jnp.sum(e, axis=-1, keepdims=True)         # exact softmax (returned weights)

    ctx = jnp.einsum("nqk,nkd->nqd", w, vh,
                     preferred_element_type=jnp.float32)                  # [B*H, S, DK]
    attn_cat = ctx.reshape(B, H, S, DK).transpose(0, 2, 1, 3).reshape(B * S, D)

    # ---- output projection + residual + LayerNorm 1 --------------------------
    proj = jnp.dot(attn_cat, wo_ref[...], preferred_element_type=jnp.float32) + b_o
    res1 = x + proj
    mu1 = jnp.mean(res1, axis=-1, keepdims=True)
    var1 = jnp.mean((res1 - mu1) ** 2, axis=-1, keepdims=True)
    norm1 = (res1 - mu1) * jax.lax.rsqrt(var1 + EPS) * ln1g + ln1b

    # ---- position-wise FFN + residual + LayerNorm 2 ---------------------------
    h1 = jnp.maximum(
        jnp.dot(norm1, w1_ref[...], preferred_element_type=jnp.float32) + b_1, 0.0)
    ffn = jnp.dot(h1, w2_ref[...], preferred_element_type=jnp.float32) + b_2
    res2 = norm1 + ffn
    mu2 = jnp.mean(res2, axis=-1, keepdims=True)
    var2 = jnp.mean((res2 - mu2) ** 2, axis=-1, keepdims=True)
    norm2 = (res2 - mu2) * jax.lax.rsqrt(var2 + EPS) * ln2g + ln2b

    # ---- two outputs: no lane concat, no wrapper-side unpacking ----------------
    out_ref[...] = norm2.reshape(B, S, D).astype(out_ref.dtype)
    attn_ref[...] = w.reshape(B, H, S, S).astype(attn_ref.dtype)


@jax.jit
def decoder_layer(x, mask, w_qkv, wo, w1, w2, pvec):
    """Wrapper does nothing but the pallas_call (all prep lives inside the kernel)."""
    vmem = pl.BlockSpec(memory_space=pltpu.MemorySpace.VMEM)
    out, attn = pl.pallas_call(
        decoder_layer_kernel,
        out_shape=(jax.ShapeDtypeStruct((B, S, D), jnp.float32),
                   jax.ShapeDtypeStruct((B, H, S, S), jnp.float32)),
        in_specs=[vmem] * 7,
        out_specs=(vmem, vmem),
    )(x, mask, w_qkv, wo, w1, w2, pvec)
    return out, attn


def pack_params(p):
    """Pack the 16 parameter tensors into 5 kernel operands (done once, outside jit)."""
    # Q/K/V weights, each in its own 128-lane slot so kernel slices are vreg-aligned.
    w_qkv = jnp.zeros((D, WQKV_W), jnp.float32)
    w_qkv = w_qkv.at[:, QOFF:QOFF + D].set(p["wq"])
    w_qkv = w_qkv.at[:, KOFF:KOFF + D].set(p["wk"])
    w_qkv = w_qkv.at[:, VOFF:VOFF + D].set(p["wv"])

    # all small vectors in one lane-aligned pack (slices only at lane offset 0)
    rows = [p["bq"], p["bk"], p["bv"], p["bo"], p["ln1g"], p["ln1b"],
            p["b1"], p["b2"], p["ln2g"], p["ln2b"]]
    pvec = jnp.zeros((16, PW), jnp.float32)
    for i, vrow in enumerate(rows):
        pvec = pvec.at[i:i + 1, 0:vrow.shape[1]].set(vrow)

    return w_qkv, p["wo"], p["w1"], p["w2"], pvec


def init_params(key):
    ks = jax.random.split(key, 16)
    s = 0.1
    return {
        "wq": jax.random.normal(ks[0], (D, D), jnp.float32) * s,
        "bq": jax.random.normal(ks[1], (1, D), jnp.float32) * s,
        "wk": jax.random.normal(ks[2], (D, D), jnp.float32) * s,
        "bk": jax.random.normal(ks[3], (1, D), jnp.float32) * s,
        "wv": jax.random.normal(ks[4], (D, D), jnp.float32) * s,
        "bv": jax.random.normal(ks[5], (1, D), jnp.float32) * s,
        "wo": jax.random.normal(ks[6], (D, D), jnp.float32) * s,
        "bo": jax.random.normal(ks[7], (1, D), jnp.float32) * s,
        "ln1g": jnp.ones((1, D), jnp.float32),
        "ln1b": jnp.zeros((1, D), jnp.float32),
        "w1": jax.random.normal(ks[8], (D, FF), jnp.float32) * s,
        "b1": jax.random.normal(ks[9], (1, FF), jnp.float32) * s,
        "w2": jax.random.normal(ks[10], (FF, D), jnp.float32) * s,
        "b2": jax.random.normal(ks[11], (1, D), jnp.float32) * s,
        "ln2g": jnp.ones((1, D), jnp.float32),
        "ln2b": jnp.zeros((1, D), jnp.float32),
    }


def reference(x, mask, p):
    """Pure-JAX reference matching the PyTorch forward (dropout = identity)."""
    def ln(z, g, b):
        mu = jnp.mean(z, axis=-1, keepdims=True)
        var = jnp.mean((z - mu) ** 2, axis=-1, keepdims=True)
        return (z - mu) / jnp.sqrt(var + EPS) * g + b

    q = x @ p["wq"] + p["bq"]
    k = x @ p["wk"] + p["bk"]
    v = x @ p["wv"] + p["bv"]
    qh = q.reshape(B, S, H, DK).transpose(0, 2, 1, 3)
    kh = k.reshape(B, S, H, DK).transpose(0, 2, 1, 3)
    vh = v.reshape(B, S, H, DK).transpose(0, 2, 1, 3)
    scores = jnp.einsum("bhqd,bhkd->bhqk", qh, kh) / math.sqrt(DK)
    scores = jnp.where(mask[:, None, :, :] == 0, NEG, scores)
    w = jax.nn.softmax(scores, axis=-1)
    att = jnp.einsum("bhqk,bhkd->bhqd", w, vh).transpose(0, 2, 1, 3).reshape(B, S, D)
    att = att @ p["wo"] + p["bo"]
    norm1 = ln(x + att, p["ln1g"], p["ln1b"])
    ffn = jnp.maximum(norm1 @ p["w1"] + p["b1"], 0.0) @ p["w2"] + p["b2"]
    out = ln(norm1 + ffn, p["ln2g"], p["ln2b"])
    return out, w


if __name__ == "__main__":
    key = jax.random.PRNGKey(0)
    kx, kp = jax.random.split(key)
    x = jax.random.normal(kx, (B, S, D), jnp.float32)
    # causal mask [B, S, S] (1 = attend, 0 = masked)
    mask = jnp.broadcast_to(jnp.tril(jnp.ones((S, S), jnp.float32)), (B, S, S))
    params = init_params(kp)
    packed = pack_params(params)

    out, attn = decoder_layer(x, mask, *packed)
    jax.block_until_ready(out)
    jax.block_until_ready(attn)

    out_ref, attn_ref = reference(x, mask, params)
    np.testing.assert_allclose(np.asarray(out), np.asarray(out_ref), atol=1e-4, rtol=1e-4)
    np.testing.assert_allclose(np.asarray(attn), np.asarray(attn_ref), atol=1e-4, rtol=1e-4)

    print("KERNEL_OK")
</pallas_src>

<mosaic_0001>
module attributes {stable_mosaic.version = 11 : i64} {
  func.func @decoder_layer_kernel(%arg0: memref<2x8x32xf32, #tpu.memory_space<vmem>>, %arg1: memref<2x8x8xf32, #tpu.memory_space<vmem>>, %arg2: memref<32x384xf32, #tpu.memory_space<vmem>>, %arg3: memref<32x32xf32, #tpu.memory_space<vmem>>, %arg4: memref<32x64xf32, #tpu.memory_space<vmem>>, %arg5: memref<64x32xf32, #tpu.memory_space<vmem>>, %arg6: memref<16x128xf32, #tpu.memory_space<vmem>>, %arg7: memref<2x8x32xf32, #tpu.memory_space<vmem>>, %arg8: memref<2x4x8x8xf32, #tpu.memory_space<vmem>>) attributes {dimension_semantics = [], scalar_prefetch = 0 : i64, scratch_operands = 0 : i64, tpu.core_type = #tpu.core_type<tc>} {
    %c0 = arith.constant 0 : index
    %c0_0 = arith.constant 0 : index
    %c0_1 = arith.constant 0 : index
    %0 = vector.load %arg0[%c0, %c0_0, %c0_1] : memref<2x8x32xf32, #tpu.memory_space<vmem>>, vector<2x8x32xf32>
    %1 = vector.shape_cast %0 : vector<2x8x32xf32> to vector<16x32xf32>
    %c0_2 = arith.constant 0 : index
    %c0_3 = arith.constant 0 : index
    %c0_4 = arith.constant 0 : index
    %2 = vector.load %arg1[%c0_2, %c0_3, %c0_4] : memref<2x8x8xf32, #tpu.memory_space<vmem>>, vector<2x8x8xf32>
    %c0_5 = arith.constant 0 : index
    %c0_6 = arith.constant 0 : index
    %3 = vector.load %arg6[%c0_5, %c0_6] : memref<16x128xf32, #tpu.memory_space<vmem>>, vector<1x32xf32>
    %c1 = arith.constant 1 : index
    %c0_7 = arith.constant 0 : index
    %4 = vector.load %arg6[%c1, %c0_7] : memref<16x128xf32, #tpu.memory_space<vmem>>, vector<1x32xf32>
    %c2 = arith.constant 2 : index
    %c0_8 = arith.constant 0 : index
    %5 = vector.load %arg6[%c2, %c0_8] : memref<16x128xf32, #tpu.memory_space<vmem>>, vector<1x32xf32>
    %c3 = arith.constant 3 : index
    %c0_9 = arith.constant 0 : index
    %6 = vector.load %arg6[%c3, %c0_9] : memref<16x128xf32, #tpu.memory_space<vmem>>, vector<1x32xf32>
    %c4 = arith.constant 4 : index
    %c0_10 = arith.constant 0 : index
    %7 = vector.load %arg6[%c4, %c0_10] : memref<16x128xf32, #tpu.memory_space<vmem>>, vector<1x32xf32>
    %c5 = arith.constant 5 : index
    %c0_11 = arith.constant 0 : index
    %8 = vector.load %arg6[%c5, %c0_11] : memref<16x128xf32, #tpu.memory_space<vmem>>, vector<1x32xf32>
    %c6 = arith.constant 6 : index
    %c0_12 = arith.constant 0 : index
    %9 = vector.load %arg6[%c6, %c0_12] : memref<16x128xf32, #tpu.memory_space<vmem>>, vector<1x64xf32>
    %c7 = arith.constant 7 : index
    %c0_13 = arith.constant 0 : index
    %10 = vector.load %arg6[%c7, %c0_13] : memref<16x128xf32, #tpu.memory_space<vmem>>, vector<1x32xf32>
    %c8 = arith.constant 8 : index
    %c0_14 = arith.constant 0 : index
    %11 = vector.load %arg6[%c8, %c0_14] : memref<16x128xf32, #tpu.memory_space<vmem>>, vector<1x32xf32>
    %c9 = arith.constant 9 : index
    %c0_15 = arith.constant 0 : index
    %12 = vector.load %arg6[%c9, %c0_15] : memref<16x128xf32, #tpu.memory_space<vmem>>, vector<1x32xf32>
    %c0_16 = arith.constant 0 : index
    %c0_17 = arith.constant 0 : index
    %13 = vector.load %arg2[%c0_16, %c0_17] : memref<32x384xf32, #tpu.memory_space<vmem>>, vector<32x384xf32>
    %cst = arith.constant dense<0.000000e+00> : vector<16x384xf32>
    %14 = tpu.matmul %1, %13, %cst {dimension_numbers = #tpu.dot_dimension_numbers<[1], [0], [0], [1], [0, 0, 1, 1], [], []>} : vector<16x32xf32>, vector<32x384xf32>, vector<16x384xf32> -> vector<16x384xf32>
    %15 = vector.extract_strided_slice %14 {offsets = [0, 0], sizes = [16, 32], strides = [1, 1]} : vector<16x384xf32> to vector<16x32xf32>
    %16 = vector.broadcast %3 : vector<1x32xf32> to vector<16x32xf32>
    %17 = arith.addf %15, %16 : vector<16x32xf32>
    %18 = vector.extract_strided_slice %14 {offsets = [0, 128], sizes = [16, 32], strides = [1, 1]} : vector<16x384xf32> to vector<16x32xf32>
    %19 = vector.broadcast %4 : vector<1x32xf32> to vector<16x32xf32>
    %20 = arith.addf %18, %19 : vector<16x32xf32>
    %21 = vector.extract_strided_slice %14 {offsets = [0, 256], sizes = [16, 32], strides = [1, 1]} : vector<16x384xf32> to vector<16x32xf32>
    %22 = vector.broadcast %5 : vector<1x32xf32> to vector<16x32xf32>
    %23 = arith.addf %21, %22 : vector<16x32xf32>
    %24 = vector.shape_cast %17 : vector<16x32xf32> to vector<2x8x4x8xf32>
    %25 = tpu.transpose %24, [0, 2, 1, 3] : vector<2x8x4x8xf32> -> vector<2x4x8x8xf32>
    %26 = vector.shape_cast %25 : vector<2x4x8x8xf32> to vector<8x8x8xf32>
    %27 = vector.shape_cast %20 : vector<16x32xf32> to vector<2x8x4x8xf32>
    %28 = tpu.transpose %27, [0, 2, 1, 3] : vector<2x8x4x8xf32> -> vector<2x4x8x8xf32>
    %29 = vector.shape_cast %28 : vector<2x4x8x8xf32> to vector<8x8x8xf32>
    %30 = vector.shape_cast %23 : vector<16x32xf32> to vector<2x8x4x8xf32>
    %31 = tpu.transpose %30, [0, 2, 1, 3] : vector<2x8x4x8xf32> -> vector<2x4x8x8xf32>
    %32 = vector.shape_cast %31 : vector<2x4x8x8xf32> to vector<8x8x8xf32>
    "tpu.trace_start"() <{level = 10 : i32, message = "nqd,nkd->nqk"}> : () -> ()
    %cst_18 = arith.constant dense<0.000000e+00> : vector<8x8x8xf32>
    %33 = tpu.matmul %26, %29, %cst_18 {dimension_numbers = #tpu.dot_dimension_numbers<[2], [2], [1], [1], [0, 0, 0, 1, 1, 1], [0], [0]>} : vector<8x8x8xf32>, vector<8x8x8xf32>, vector<8x8x8xf32> -> vector<8x8x8xf32>
    "tpu.trace_stop"() : () -> ()
    %cst_19 = arith.constant 0.353553385 : f32
    %34 = vector.broadcast %cst_19 : f32 to vector<8x8x8xf32>
    %35 = arith.mulf %33, %34 : vector<8x8x8xf32>
    %36 = vector.shape_cast %2 : vector<2x8x8xf32> to vector<2x1x8x8xf32>
    %37 = vector.shape_cast %36 : vector<2x1x8x8xf32> to vector<2x1x8x8xf32>
    %38 = vector.broadcast %37 : vector<2x1x8x8xf32> to vector<2x4x8x8xf32>
    %39 = vector.shape_cast %38 : vector<2x4x8x8xf32> to vector<8x8x8xf32>
    %cst_20 = arith.constant 0.000000e+00 : f32
    %40 = vector.broadcast %cst_20 : f32 to vector<8x8x8xf32>
    %41 = arith.cmpf oeq, %39, %40 : vector<8x8x8xf32>
    %cst_21 = arith.constant -1.000000e+09 : f32
    %42 = vector.broadcast %cst_21 : f32 to vector<8x8x8xf32>
    %43 = arith.select %41, %42, %35 : vector<8x8x8xi1>, vector<8x8x8xf32>
    %cst_22 = arith.constant dense<0xFF800000> : vector<8x8xf32>
    %44 = vector.multi_reduction <maximumf>, %43, %cst_22 [2] : vector<8x8x8xf32> to vector<8x8xf32>
    %45 = vector.shape_cast %44 : vector<8x8xf32> to vector<8x8x1xf32>
    %46 = vector.broadcast %45 : vector<8x8x1xf32> to vector<8x8x8xf32>
    %47 = arith.subf %43, %46 : vector<8x8x8xf32>
    %48 = math.exp %47 : vector<8x8x8xf32>
    %cst_23 = arith.constant dense<0.000000e+00> : vector<8x8xf32>
    %49 = vector.multi_reduction <add>, %48, %cst_23 [2] : vector<8x8x8xf32> to vector<8x8xf32>
    %50 = vector.shape_cast %49 : vector<8x8xf32> to vector<8x8x1xf32>
    %51 = vector.broadcast %50 : vector<8x8x1xf32> to vector<8x8x8xf32>
    %52 = arith.divf %48, %51 : vector<8x8x8xf32>
    "tpu.trace_start"() <{level = 10 : i32, message = "nqk,nkd->nqd"}> : () -> ()
    %cst_24 = arith.constant dense<0.000000e+00> : vector<8x8x8xf32>
    %53 = tpu.matmul %52, %32, %cst_24 {dimension_numbers = #tpu.dot_dimension_numbers<[2], [1], [1], [2], [0, 0, 0, 1, 1, 2], [0], [0]>} : vector<8x8x8xf32>, vector<8x8x8xf32>, vector<8x8x8xf32> -> vector<8x8x8xf32>
    "tpu.trace_stop"() : () -> ()
    %54 = vector.shape_cast %53 : vector<8x8x8xf32> to vector<2x4x8x8xf32>
    %55 = tpu.transpose %54, [0, 2, 1, 3] : vector<2x4x8x8xf32> -> vector<2x8x4x8xf32>
    %56 = vector.shape_cast %55 : vector<2x8x4x8xf32> to vector<16x32xf32>
    %c0_25 = arith.constant 0 : index
    %c0_26 = arith.constant 0 : index
    %57 = vector.load %arg3[%c0_25, %c0_26] : memref<32x32xf32, #tpu.memory_space<vmem>>, vector<32x32xf32>
    %cst_27 = arith.constant dense<0.000000e+00> : vector<16x32xf32>
    %58 = tpu.matmul %56, %57, %cst_27 {dimension_numbers = #tpu.dot_dimension_numbers<[1], [0], [0], [1], [0, 0, 1, 1], [], []>} : vector<16x32xf32>, vector<32x32xf32>, vector<16x32xf32> -> vector<16x32xf32>
    %59 = vector.broadcast %6 : vector<1x32xf32> to vector<16x32xf32>
    %60 = arith.addf %58, %59 : vector<16x32xf32>
    %61 = arith.addf %1, %60 : vector<16x32xf32>
    %cst_28 = arith.constant dense<0.000000e+00> : vector<16xf32>
    %62 = vector.multi_reduction <add>, %61, %cst_28 [1] : vector<16x32xf32> to vector<16xf32>
    %63 = vector.shape_cast %62 : vector<16xf32> to vector<16x1xf32>
    %cst_29 = arith.constant 3.200000e+01 : f32
    %64 = vector.broadcast %cst_29 : f32 to vector<16x1xf32>
    %65 = arith.divf %63, %64 : vector<16x1xf32>
    %66 = vector.broadcast %65 : vector<16x1xf32> to vector<16x32xf32>
    %67 = arith.subf %61, %66 : vector<16x32xf32>
    %68 = arith.mulf %67, %67 : vector<16x32xf32>
    %cst_30 = arith.constant dense<0.000000e+00> : vector<16xf32>
    %69 = vector.multi_reduction <add>, %68, %cst_30 [1] : vector<16x32xf32> to vector<16xf32>
    %70 = vector.shape_cast %69 : vector<16xf32> to vector<16x1xf32>
    %cst_31 = arith.constant 3.200000e+01 : f32
    %71 = vector.broadcast %cst_31 : f32 to vector<16x1xf32>
    %72 = arith.divf %70, %71 : vector<16x1xf32>
    %73 = vector.broadcast %65 : vector<16x1xf32> to vector<16x32xf32>
    %74 = arith.subf %61, %73 : vector<16x32xf32>
    %cst_32 = arith.constant 9.99999974E-6 : f32
    %75 = vector.broadcast %cst_32 : f32 to vector<16x1xf32>
    %76 = arith.addf %72, %75 : vector<16x1xf32>
    %77 = math.rsqrt %76 : vector<16x1xf32>
    %78 = vector.broadcast %77 : vector<16x1xf32> to vector<16x32xf32>
    %79 = arith.mulf %74, %78 : vector<16x32xf32>
    %80 = vector.broadcast %7 : vector<1x32xf32> to vector<16x32xf32>
    %81 = arith.mulf %79, %80 : vector<16x32xf32>
    %82 = vector.broadcast %8 : vector<1x32xf32> to vector<16x32xf32>
    %83 = arith.addf %81, %82 : vector<16x32xf32>
    %c0_33 = arith.constant 0 : index
    %c0_34 = arith.constant 0 : index
    %84 = vector.load %arg4[%c0_33, %c0_34] : memref<32x64xf32, #tpu.memory_space<vmem>>, vector<32x64xf32>
    %cst_35 = arith.constant dense<0.000000e+00> : vector<16x64xf32>
    %85 = tpu.matmul %83, %84, %cst_35 {dimension_numbers = #tpu.dot_dimension_numbers<[1], [0], [0], [1], [0, 0, 1, 1], [], []>} : vector<16x32xf32>, vector<32x64xf32>, vector<16x64xf32> -> vector<16x64xf32>
    %86 = vector.broadcast %9 : vector<1x64xf32> to vector<16x64xf32>
    %87 = arith.addf %85, %86 : vector<16x64xf32>
    %cst_36 = arith.constant 0.000000e+00 : f32
    %88 = vector.broadcast %cst_36 : f32 to vector<16x64xf32>
    %89 = arith.maximumf %87, %88 : vector<16x64xf32>
    %c0_37 = arith.constant 0 : index
    %c0_38 = arith.constant 0 : index
    %90 = vector.load %arg5[%c0_37, %c0_38] : memref<64x32xf32, #tpu.memory_space<vmem>>, vector<64x32xf32>
    %cst_39 = arith.constant dense<0.000000e+00> : vector<16x32xf32>
    %91 = tpu.matmul %89, %90, %cst_39 {dimension_numbers = #tpu.dot_dimension_numbers<[1], [0], [0], [1], [0, 0, 1, 1], [], []>} : vector<16x64xf32>, vector<64x32xf32>, vector<16x32xf32> -> vector<16x32xf32>
    %92 = vector.broadcast %10 : vector<1x32xf32> to vector<16x32xf32>
    %93 = arith.addf %91, %92 : vector<16x32xf32>
    %94 = arith.addf %83, %93 : vector<16x32xf32>
    %cst_40 = arith.constant dense<0.000000e+00> : vector<16xf32>
    %95 = vector.multi_reduction <add>, %94, %cst_40 [1] : vector<16x32xf32> to vector<16xf32>
    %96 = vector.shape_cast %95 : vector<16xf32> to vector<16x1xf32>
    %cst_41 = arith.constant 3.200000e+01 : f32
    %97 = vector.broadcast %cst_41 : f32 to vector<16x1xf32>
    %98 = arith.divf %96, %97 : vector<16x1xf32>
    %99 = vector.broadcast %98 : vector<16x1xf32> to vector<16x32xf32>
    %100 = arith.subf %94, %99 : vector<16x32xf32>
    %101 = arith.mulf %100, %100 : vector<16x32xf32>
    %cst_42 = arith.constant dense<0.000000e+00> : vector<16xf32>
    %102 = vector.multi_reduction <add>, %101, %cst_42 [1] : vector<16x32xf32> to vector<16xf32>
    %103 = vector.shape_cast %102 : vector<16xf32> to vector<16x1xf32>
    %cst_43 = arith.constant 3.200000e+01 : f32
    %104 = vector.broadcast %cst_43 : f32 to vector<16x1xf32>
    %105 = arith.divf %103, %104 : vector<16x1xf32>
    %106 = vector.broadcast %98 : vector<16x1xf32> to vector<16x32xf32>
    %107 = arith.subf %94, %106 : vector<16x32xf32>
    %cst_44 = arith.constant 9.99999974E-6 : f32
    %108 = vector.broadcast %cst_44 : f32 to vector<16x1xf32>
    %109 = arith.addf %105, %108 : vector<16x1xf32>
    %110 = math.rsqrt %109 : vector<16x1xf32>
    %111 = vector.broadcast %110 : vector<16x1xf32> to vector<16x32xf32>
    %112 = arith.mulf %107, %111 : vector<16x32xf32>
    %113 = vector.broadcast %11 : vector<1x32xf32> to vector<16x32xf32>
    %114 = arith.mulf %112, %113 : vector<16x32xf32>
    %115 = vector.broadcast %12 : vector<1x32xf32> to vector<16x32xf32>
    %116 = arith.addf %114, %115 : vector<16x32xf32>
    %117 = vector.shape_cast %116 : vector<16x32xf32> to vector<2x8x32xf32>
    %c0_45 = arith.constant 0 : index
    %c0_46 = arith.constant 0 : index
    %c0_47 = arith.constant 0 : index
    %118 = vector.load %arg7[%c0_45, %c0_46, %c0_47] : memref<2x8x32xf32, #tpu.memory_space<vmem>>, vector<2x8x32xf32>
    tpu.vector_store %arg7[%c0_45, %c0_46, %c0_47], %117 {strides = array<i32>} : memref<2x8x32xf32, #tpu.memory_space<vmem>>, vector<2x8x32xf32>,
    %119 = vector.shape_cast %52 : vector<8x8x8xf32> to vector<2x4x8x8xf32>
    %c0_48 = arith.constant 0 : index
    %c0_49 = arith.constant 0 : index
    %c0_50 = arith.constant 0 : index
    %c0_51 = arith.constant 0 : index
    %120 = vector.load %arg8[%c0_48, %c0_49, %c0_50, %c0_51] : memref<2x4x8x8xf32, #tpu.memory_space<vmem>>, vector<2x4x8x8xf32>
    tpu.vector_store %arg8[%c0_48, %c0_49, %c0_50, %c0_51], %119 {strides = array<i32>} : memref<2x4x8x8xf32, #tpu.memory_space<vmem>>, vector<2x4x8x8xf32>,
    return
  }
}

</mosaic_0001>

<llo_original>
// kernel: decoder_layer.1
$region0: #{decoder_layer.1}
  #allocation0 [shape = 'u32[]', space=smem, size = 0x4, offset = 0x4, fixed_abs, tag = 'smem constant byte address 0x4 - core index']
  #allocation1 [shape = 'u32[144,128]{1,0:T(1,128)}', space=vmem, size = 0x12000, scoped, tag = 'internal scratch']
  %s0 = inlined_call_operand.hbm [shape: f32[2,8,32], index: 0, kind: input, shape index: {}]
  %s1 = inlined_call_operand.hbm [shape: f32[2,8,8], index: 1, kind: input, shape index: {}]
  %s2 = inlined_call_operand.vmem [shape: f32[32,384], index: 2, kind: input, shape index: {}]
  %s3 = inlined_call_operand.hbm [shape: f32[32,32], index: 3, kind: input, shape index: {}]
  %s4 = inlined_call_operand.hbm [shape: f32[32,64], index: 4, kind: input, shape index: {}]
  %s5 = inlined_call_operand.vmem [shape: f32[64,32], index: 5, kind: input, shape index: {}]
  %s6 = inlined_call_operand.vmem [shape: f32[16,128], index: 6, kind: input, shape index: {}]
  %s7 = inlined_call_operand.hbm [shape: f32[2,8,32], index: 7, kind: output, shape index: {0}]
  %s8 = inlined_call_operand.hbm [shape: f32[2,4,8,8], index: 8, kind: output, shape index: {1}]
  %9 = xla_tuple %s7, %s8
  %s10 = sld [smem:[#allocation0]]
  $region62: #{decoder_layer.1} parent=0
    _
  %s12 = ssub.s32 1, %s10
  %s13 = scalar_select 0, %s12, %s10
  $region1: #{decoder_layer.1} parent=0
    #allocation2 [shape = 'u8[8192]{0}', space=vmem, size = 0x2000, scoped, tag = 'input window, operand 0, single buffered']
    #allocation3 [shape = 's32[1]{0}', space=sflag, size = 0x4, scoped, tag = 'scoped memory for decoder_layer.1']
    #allocation4 [shape = 's32[1]{0}', space=sflag, size = 0x4, scoped, tag = 'scoped memory for decoder_layer.1']
    #allocation5 [shape = 'u8[8192]{0}', space=vmem, size = 0x2000, scoped, tag = 'input window, operand 1, single buffered']
    #allocation6 [shape = 's32[1]{0}', space=sflag, size = 0x4, scoped, tag = 'scoped memory for decoder_layer.1']
    #allocation7 [shape = 'u8[16384]{0}', space=vmem, size = 0x4000, scoped, tag = 'input window, operand 3, single buffered']
    #allocation8 [shape = 'u8[16384]{0}', space=vmem, size = 0x4000, scoped, tag = 'input window, operand 4, single buffered']
    #allocation9 [shape = 's32[1]{0}', space=sflag, size = 0x4, scoped, tag = 'scoped memory for decoder_layer.1']
    #allocation10 [shape = 'u8[8192]{0}', space=vmem, size = 0x2000, scoped, tag = 'output window, operand 0, single buffered']
    #allocation11 [shape = 'u8[32768]{0}', space=vmem, size = 0x8000, scoped, tag = 'output window, operand 1, single buffered']
    #allocation12 [shape = 's32[1]{0}', space=sflag, size = 0x4, scoped, tag = 'scoped memory for decoder_layer.1']
    %14 = vsyncpa [#allocation3], 0
    %15 = vsyncpa [#allocation6], 0
    %16 = vsyncpa [#allocation9], 0
    %17 = vsyncpa [#allocation4], 0
    %18 = vsyncpa [#allocation12], 0
    // Predicated region
    $region2: #{decoder_layer.1} parent=1 // pred_check
      _
    $region3: #{decoder_layer.1} parent=1 // pred_check_branch
      %20 = sbr.rel (0) target = $region5
    $region4: #{decoder_layer.1} parent=1 // pred_region
      %s22 = ssub.s32 256, 256
      %23 = vsyncadd [#allocation3], %s22
      %s24 = sshll.u32 [#allocation2], 4
      %s25 = int_to_ptr.vmem [resolvable:$true] %s24
      %30 = dma.hbm_to_vmem [thread:$0]  %s0, 256, %s25, [#allocation3], 128, 128, 8
    $region5: #{decoder_layer.1} parent=1 // pred_fallthru
      _
    // Predicated region
    $region6: #{decoder_layer.1} parent=1 // pred_check
      _
    $region7: #{decoder_layer.1} parent=1 // pred_check_branch
      %32 = sbr.rel (0) target = $region9
    $region8: #{decoder_layer.1} parent=1 // pred_region
      %s34 = ssub.s32 256, 256
      %35 = vsyncadd [#allocation6], %s34
      %s36 = sshll.u32 [#allocation5], 4
      %s37 = int_to_ptr.vmem [resolvable:$true] %s36
      %42 = dma.hbm_to_vmem [thread:$0]  %s1, 256, %s37, [#allocation6], 128, 128, 8
    $region9: #{decoder_layer.1} parent=1 // pred_fallthru
      _
    // Predicated region
    $region10: #{decoder_layer.1} parent=1 // pred_check
      _
    $region11: #{decoder_layer.1} parent=1 // pred_check_branch
      %44 = sbr.rel (0) target = $region13
    $region12: #{decoder_layer.1} parent=1 // pred_region
      _
    $region13: #{decoder_layer.1} parent=1 // pred_fallthru
      _
    // Predicated region
    $region14: #{decoder_layer.1} parent=1 // pred_check
      _
    $region15: #{decoder_layer.1} parent=1 // pred_check_branch
      %46 = sbr.rel (0) target = $region17
    $region16: #{decoder_layer.1} parent=1 // pred_region
      %s48 = ssub.s32 512, 512
      %49 = vsyncadd [#allocation6], %s48
      %s50 = sshll.u32 [#allocation7], 4
      %s51 = int_to_ptr.vmem [resolvable:$true] %s50
      %56 = dma.hbm_to_vmem [thread:$0]  %s3, 512, %s51, [#allocation6], 128, 128, 8
    $region17: #{decoder_layer.1} parent=1 // pred_fallthru
      _
    // Predicated region
    $region18: #{decoder_layer.1} parent=1 // pred_check
      _
    $region19: #{decoder_layer.1} parent=1 // pred_check_branch
      %58 = sbr.rel (0) target = $region21
    $region20: #{decoder_layer.1} parent=1 // pred_region
      %s60 = ssub.s32 512, 512
      %61 = vsyncadd [#allocation9], %s60
      %s62 = sshll.u32 [#allocation8], 4
      %s63 = int_to_ptr.vmem [resolvable:$true] %s62
      %68 = dma.hbm_to_vmem [thread:$0]  %s4, 512, %s63, [#allocation9], 128, 128, 8
    $region21: #{decoder_layer.1} parent=1 // pred_fallthru
      _
    // Predicated region
    $region22: #{decoder_layer.1} parent=1 // pred_check
      _
    $region23: #{decoder_layer.1} parent=1 // pred_check_branch
      %70 = sbr.rel (0) target = $region25
    $region24: #{decoder_layer.1} parent=1 // pred_region
      _
    $region25: #{decoder_layer.1} parent=1 // pred_fallthru
      _
    // Predicated region
    $region26: #{decoder_layer.1} parent=1 // pred_check
      _
    $region27: #{decoder_layer.1} parent=1 // pred_check_branch
      %72 = sbr.rel (0) target = $region29
    $region28: #{decoder_layer.1} parent=1 // pred_region
      _
    $region29: #{decoder_layer.1} parent=1 // pred_fallthru
      _
    // Predicated region
    $region30: #{decoder_layer.1} parent=1 // pred_check
      _
    $region31: #{decoder_layer.1} parent=1 // pred_check_branch
      %74 = sbr.rel (0) target = $region33
    $region32: #{decoder_layer.1} parent=1 // pred_region
      %75 = dma.done [#allocation3], 256
    $region33: #{decoder_layer.1} parent=1 // pred_fallthru
      _
    // Predicated region
    $region34: #{decoder_layer.1} parent=1 // pred_check
      _
    $region35: #{decoder_layer.1} parent=1 // pred_check_branch
      %77 = sbr.rel (0) target = $region37
    $region36: #{decoder_layer.1} parent=1 // pred_region
      %78 = dma.done [#allocation6], 256
    $region37: #{decoder_layer.1} parent=1 // pred_fallthru
      _
    // Predicated region
    $region38: #{decoder_layer.1} parent=1 // pred_check
      _
    $region39: #{decoder_layer.1} parent=1 // pred_check_branch
      %80 = sbr.rel (0) target = $region41
    $region40: #{decoder_layer.1} parent=1 // pred_region
      %81 = dma.done [#allocation6], 512
    $region41: #{decoder_layer.1} parent=1 // pred_fallthru
      _
    // Predicated region
    $region42: #{decoder_layer.1} parent=1 // pred_check
      _
    $region43: #{decoder_layer.1} parent=1 // pred_check_branch
      %83 = sbr.rel (0) target = $region45
    $region44: #{decoder_layer.1} parent=1 // pred_region
      %84 = dma.done [#allocation9], 512
    $region45: #{decoder_layer.1} parent=1 // pred_fallthru
      _
    %v85 = vld [vmem:[#allocation2] sm:$0xff]
    %v86 = vld [vmem:[#allocation2 + $0x8] sm:$0xff]
    %v87 = vld [vmem:[#allocation5] sm:$0xff]
    %v88 = vld [vmem:[#allocation5 + $0x8] sm:$0xff]
    %v89 = vld [vmem:[%s6] sm:$0x1]
    %v90 = vld [vmem:[%s6 + $0x1] sm:$0x1]
    %v91 = vld [vmem:[%s6 + $0x2] sm:$0x1]
    %v92 = vld [vmem:[%s6 + $0x3] sm:$0x1]
    %v93 = vld [vmem:[%s6 + $0x4] sm:$0x1]
    %v94 = vld [vmem:[%s6 + $0x5] sm:$0x1]
    %v95 = vld [vmem:[%s6 + $0x6] sm:$0x1]
    %v96 = vld [vmem:[%s6 + $0x7] sm:$0x1]
    %v97 = vld [vmem:[%s6 + $0x8] sm:$0x1]
    %v98 = vld [vmem:[%s6 + $0x9] sm:$0x1]
    %v99 = vld [vmem:[%s2] sm:$0xff]
    %v100 = vld [vmem:[%s2 + $0x8] sm:$0xff]
    %v101 = vld [vmem:[%s2 + $0x10] sm:$0xff]
    %v102 = vld [vmem:[%s2 + $0x18] sm:$0xff]
    %v103 = vld [vmem:[%s2 + $0x20] sm:$0xff]
    %v104 = vld [vmem:[%s2 + $0x28] sm:$0xff]
    %v105 = vld [vmem:[%s2 + $0x30] sm:$0xff]
    %v106 = vld [vmem:[%s2 + $0x38] sm:$0xff]
    %v107 = vld [vmem:[%s2 + $0x40] sm:$0xff]
    %v108 = vld [vmem:[%s2 + $0x48] sm:$0xff]
    %v109 = vld [vmem:[%s2 + $0x50] sm:$0xff]
    %v110 = vld [vmem:[%s2 + $0x58] sm:$0xff]
    %vm111 = vcmask 261120
    %v113 = vsel %vm111, %v85, 0
    %v116 = vsel %vm111, %v86, 0
    %118 = vmatprep.subr.mxu0 %v100
    %119 = vmatpush1.msra.mxu0 %v99
    %120 = vmatprep.subr.mxu0 %v103
    %121 = vmatpush1.msra.mxu0 %v102
    %122 = vmatprep.subr.mxu0 %v106
    %123 = vmatpush1.msra.mxu0 %v105
    %124 = vmatprep.subr.mxu0 %v109
    %125 = vmatpush1.msra.mxu0 %v108
    %126 = vmatprep.subr.mxu0 0.0
    %127 = vmatpush1.msra.mxu0 0.0
    %128 = vmatprep.subr.mxu0 0.0
    %129 = vmatpush1.msra.mxu0 0.0
    %130 = vmatprep.subr.mxu0 0.0
    %131 = vmatpush1.msra.mxu0 0.0
    %132 = vmatprep.subr.mxu0 0.0
    %133 = vmatpush1.msra.mxu0 0.0
    %134 = vmatprep.subr.mxu0 0.0
    %135 = vmatpush1.msra.mxu0 0.0
    %136 = vmatprep.subr.mxu0 0.0
    %137 = vmatpush1.msra.mxu0 0.0
    %138 = vmatprep.subr.mxu0 0.0
    %139 = vmatpush1.msra.mxu0 0.0
    %140 = vmatprep.subr.mxu0 0.0
    %141 = vmatpush1.msra.mxu0 0.0
    %142 = vmatprep.subr.mxu0 0.0
    %143 = vmatpush1.msra.mxu0 0.0
    %144 = vmatprep.subr.mxu0 0.0
    %145 = vmatpush1.msra.mxu0 0.0
    %146 = vmatprep.subr.mxu0 0.0
    %147 = vmatpush1.msra.mxu0 0.0
    %148 = vmatprep.subr.mxu0 0.0
    %149 = vmatpush1.msra.mxu0 0.0
    %150 = vmatprep.subr.mxu0 0.0
    %151 = vmatpush1.msra.mxu0 0.0
    %152 = vmatprep.subr.mxu0 0.0
    %153 = vmatpush1.msra.mxu0 0.0
    %154 = vmatprep.subr.mxu0 0.0
    %155 = vmatpush1.msra.mxu0 0.0
    %156 = vmatprep.subr.mxu0 0.0
    %157 = vmatpush1.msra.mxu0 0.0
    %158 = vmatprep.subr.mxu0 0.0
    %159 = vmatpush1.msra.mxu0 0.0
    %160 = vmatprep.subr.mxu0 0.0
    %161 = vmatpush1.msra.mxu0 0.0
    %162 = vmatprep.subr.mxu0 0.0
    %163 = vmatpush1.msra.mxu0 0.0
    %164 = vmatprep.subr.mxu0 0.0
    %165 = vmatpush1.msra.mxu0 0.0
    %166 = vmatprep.subr.mxu0 0.0
    %167 = vmatpush1.msra.mxu0 0.0
    %168 = vmatprep.subr.mxu0 0.0
    %169 = vmatpush1.msra.mxu0 0.0
    %170 = vmatprep.subr.mxu0 0.0
    %171 = vmatpush1.msra.mxu0 0.0
    %172 = vmatprep.subr.mxu0 0.0
    %173 = vmatpush1.msra.mxu0 0.0
    %174 = vmatprep.subr.mxu0 0.0
    %175 = vmatpush1.msra.mxu0 0.0
    %176 = vmatprep.subr.mxu0 0.0
    %177 = vmatpush1.msra.mxu0 0.0
    %178 = vmatprep.subr.mxu0 0.0
    %179 = vmatpush1.msra.mxu0 0.0
    %180 = vmatprep.subr.mxu0 0.0
    %181 = vmatpush1.msra.mxu0 0.0
    %182 = vmatprep.mubr.f32.mxu0 0.0
    %183 = vmatmul.mubr.f32.gmra.mrb[0].mxu0 %v113
    %v184 = vpop.f32.mrb[0].mxu0
    %v185 = vadd.f32 0.0, %v184
    %v186 = vpop.f32.mrb[0].mxu0
    %v187 = vadd.f32 0.0, %v186
    %188 = vmatprep.mubr.f32.mxu0 0.0
    %189 = vmatmul.mubr.f32.gmra.mrb[0].mxu0 %v116
    %v190 = vpop.f32.mrb[0].mxu0
    %v191 = vadd.f32 0.0, %v190
    %v192 = vpop.f32.mrb[0].mxu0
    %v193 = vadd.f32 0.0, %v192
    %194 = vdwg.mxu0
    %195 = vmatprep.subr.mxu0 0.0
    %196 = vmatpush1.msra.mxu0 %v101
    %197 = vmatprep.subr.mxu0 0.0
    %198 = vmatpush1.msra.mxu0 %v104
    %199 = vmatprep.subr.mxu0 0.0
    %200 = vmatpush1.msra.mxu0 %v107
    %201 = vmatprep.subr.mxu0 0.0
    %202 = vmatpush1.msra.mxu0 %v110
    %203 = vmatprep.subr.mxu0 0.0
    %204 = vmatpush1.msra.mxu0 0.0
    %205 = vmatprep.subr.mxu0 0.0
    %206 = vmatpush1.msra.mxu0 0.0
    %207 = vmatprep.subr.mxu0 0.0
    %208 = vmatpush1.msra.mxu0 0.0
    %209 = vmatprep.subr.mxu0 0.0
    %210 = vmatpush1.msra.mxu0 0.0
    %211 = vmatprep.subr.mxu0 0.0
    %212 = vmatpush1.msra.mxu0 0.0
    %213 = vmatprep.subr.mxu0 0.0
    %214 = vmatpush1.msra.mxu0 0.0
    %215 = vmatprep.subr.mxu0 0.0
    %216 = vmatpush1.msra.mxu0 0.0
    %217 = vmatprep.subr.mxu0 0.0
    %218 = vmatpush1.msra.mxu0 0.0
    %219 = vmatprep.subr.mxu0 0.0
    %220 = vmatpush1.msra.mxu0 0.0
    %221 = vmatprep.subr.mxu0 0.0
    %222 = vmatpush1.msra.mxu0 0.0
    %223 = vmatprep.subr.mxu0 0.0
    %224 = vmatpush1.msra.mxu0 0.0
    %225 = vmatprep.subr.mxu0 0.0
    %226 = vmatpush1.msra.mxu0 0.0
    %227 = vmatprep.subr.mxu0 0.0
    %228 = vmatpush1.msra.mxu0 0.0
    %229 = vmatprep.subr.mxu0 0.0
    %230 = vmatpush1.msra.mxu0 0.0
    %231 = vmatprep.subr.mxu0 0.0
    %232 = vmatpush1.msra.mxu0 0.0
    %233 = vmatprep.subr.mxu0 0.0
    %234 = vmatpush1.msra.mxu0 0.0
    %235 = vmatprep.subr.mxu0 0.0
    %236 = vmatpush1.msra.mxu0 0.0
    %237 = vmatprep.subr.mxu0 0.0
    %238 = vmatpush1.msra.mxu0 0.0
    %239 = vmatprep.subr.mxu0 0.0
    %240 = vmatpush1.msra.mxu0 0.0
    %241 = vmatprep.subr.mxu0 0.0
    %242 = vmatpush1.msra.mxu0 0.0
    %243 = vmatprep.subr.mxu0 0.0
    %244 = vmatpush1.msra.mxu0 0.0
    %245 = vmatprep.subr.mxu0 0.0
    %246 = vmatpush1.msra.mxu0 0.0
    %247 = vmatprep.subr.mxu0 0.0
    %248 = vmatpush1.msra.mxu0 0.0
    %249 = vmatprep.subr.mxu0 0.0
    %250 = vmatpush1.msra.mxu0 0.0
    %251 = vmatprep.subr.mxu0 0.0
    %252 = vmatpush1.msra.mxu0 0.0
    %253 = vmatprep.subr.mxu0 0.0
    %254 = vmatpush1.msra.mxu0 0.0
    %255 = vmatprep.subr.mxu0 0.0
    %256 = vmatpush1.msra.mxu0 0.0
    %257 = vmatprep.subr.mxu0 0.0
    %258 = vmatpush1.msra.mxu0 0.0
    %259 = vmatprep.mubr.f32.mxu0 0.0
    %260 = vmatmul.mubr.f32.gmra.mrb[0].mxu0 %v113
    %v261 = vpop.f32.mrb[0].mxu0
    %v262 = vadd.f32 0.0, %v261
    %v263 = vpop.f32.mrb[0].mxu0
    %264 = vmatprep.mubr.f32.mxu0 0.0
    %265 = vmatmul.mubr.f32.gmra.mrb[0].mxu0 %v116
    %v266 = vpop.f32.mrb[0].mxu0
    %v267 = vadd.f32 0.0, %v266
    %v268 = vpop.f32.mrb[0].mxu0
    %269 = vdwg.mxu0
    %v270 = vlaneseq
    %v271 = vshrl.u32 %v270, 7
    %v272 = vsub.s32 0, %v271
    %v273 = vrot.slane %v89, %v272
    %v274 = vadd.f32 %v185, %v273
    %v275 = vadd.f32 %v191, %v273
    %v276 = vlaneseq
    %v277 = vshrl.u32 %v276, 7
    %v278 = vsub.s32 0, %v277
    %v279 = vrot.slane %v90, %v278
    %v280 = vadd.f32 %v187, %v279
    %v281 = vadd.f32 %v193, %v279
    %v282 = vlaneseq
    %v283 = vshrl.u32 %v282, 7
    %v284 = vsub.s32 0, %v283
    %v285 = vrot.slane %v91, %v284
    %v286 = vadd.f32 %v262, %v285
    %v287 = vadd.f32 %v267, %v285
    %290 = vrot.lane.b32.xlu0 %v274, 120
    %v291 = vpop.permute.xlu0 %290
    %292 = vrot.lane.b32.xlu0 %v275, 120
    %v293 = vpop.permute.xlu0 %292
    %296 = vrot.lane.b32.xlu0 %v274, 112
    %v297 = vpop.permute.xlu0 %296
    %298 = vrot.lane.b32.xlu0 %v275, 112
    %v299 = vpop.permute.xlu0 %298
    %302 = vrot.lane.b32.xlu0 %v274, 104
    %v303 = vpop.permute.xlu0 %302
    %304 = vrot.lane.b32.xlu0 %v275, 104
    %v305 = vpop.permute.xlu0 %304
    %v308 = vcombine.low %v274, %v297
    %v309 = vcombine.high %v274, %v297
    %v311 = vunpack.c.l.s4 1983009808
    %v312 = vunpack.c.0.s8 %v311
    %v313 = vlaneseq
    %v314 = vshrl.u32 %v313, 7
    %v315 = vsub.s32 %v312, %v314
    %v316 = vrot.slane %v308, %v315
    %v318 = vunpack.c.l.s4 1983009808
    %v319 = vunpack.c.0.s8 %v318
    %v320 = vlaneseq
    %v321 = vshrl.u32 %v320, 7
    %v322 = vsub.s32 %v319, %v321
    %v323 = vrot.slane %v309, %v322
    %v324 = vcombine.low %v291, %v303
    %v325 = vcombine.high %v291, %v303
    %v327 = vunpack.c.l.s4 1983009808
    %v328 = vunpack.c.0.s8 %v327
    %v329 = vlaneseq
    %v330 = vshrl.u32 %v329, 7
    %v331 = vsub.s32 %v328, %v330
    %v332 = vrot.slane %v324, %v331
    %v334 = vunpack.c.l.s4 1983009808
    %v335 = vunpack.c.0.s8 %v334
    %v336 = vlaneseq
    %v337 = vshrl.u32 %v336, 7
    %v338 = vsub.s32 %v335, %v337
    %v339 = vrot.slane %v325, %v338
    %v340 = vcombine.low %v316, %v332
    %v341 = vcombine.high %v316, %v332
    %v343 = vunpack.c.l.s4 1934713408
    %v344 = vunpack.c.0.s8 %v343
    %v345 = vlaneseq
    %v346 = vshrl.u32 %v345, 7
    %v347 = vsub.s32 %v344, %v346
    %v348 = vrot.slane %v340, %v347
    %v350 = vunpack.c.l.s4 1934713408
    %v351 = vunpack.c.0.s8 %v350
    %v352 = vlaneseq
    %v353 = vshrl.u32 %v352, 7
    %v354 = vsub.s32 %v351, %v353
    %v355 = vrot.slane %v341, %v354
    %v356 = vcombine.low %v323, %v339
    %v357 = vcombine.high %v323, %v339
    %v359 = vunpack.c.l.s4 1934713408
    %v360 = vunpack.c.0.s8 %v359
    %v361 = vlaneseq
    %v362 = vshrl.u32 %v361, 7
    %v363 = vsub.s32 %v360, %v362
    %v364 = vrot.slane %v356, %v363
    %v366 = vunpack.c.l.s4 1934713408
    %v367 = vunpack.c.0.s8 %v366
    %v368 = vlaneseq
    %v369 = vshrl.u32 %v368, 7
    %v370 = vsub.s32 %v367, %v369
    %v371 = vrot.slane %v357, %v370
    %v372 = vcombine.high %v348, 0.0
    %v373 = vcombine.high %v355, 0.0
    %v374 = vcombine.high %v364, 0.0
    %v375 = vcombine.high %v371, 0.0
    %v376 = vcombine.low %v275, %v299
    %v377 = vcombine.high %v275, %v299
    %v379 = vunpack.c.l.s4 1983009808
    %v380 = vunpack.c.0.s8 %v379
    %v381 = vlaneseq
    %v382 = vshrl.u32 %v381, 7
    %v383 = vsub.s32 %v380, %v382
    %v384 = vrot.slane %v376, %v383
    %v386 = vunpack.c.l.s4 1983009808
    %v387 = vunpack.c.0.s8 %v386
    %v388 = vlaneseq
    %v389 = vshrl.u32 %v388, 7
    %v390 = vsub.s32 %v387, %v389
    %v391 = vrot.slane %v377, %v390
    %v392 = vcombine.low %v293, %v305
    %v393 = vcombine.high %v293, %v305
    %v395 = vunpack.c.l.s4 1983009808
    %v396 = vunpack.c.0.s8 %v395
    %v397 = vlaneseq
    %v398 = vshrl.u32 %v397, 7
    %v399 = vsub.s32 %v396, %v398
    %v400 = vrot.slane %v392, %v399
    %v402 = vunpack.c.l.s4 1983009808
    %v403 = vunpack.c.0.s8 %v402
    %v404 = vlaneseq
    %v405 = vshrl.u32 %v404, 7
    %v406 = vsub.s32 %v403, %v405
    %v407 = vrot.slane %v393, %v406
    %v408 = vcombine.low %v384, %v400
    %v409 = vcombine.high %v384, %v400
    %v411 = vunpack.c.l.s4 1934713408
    %v412 = vunpack.c.0.s8 %v411
    %v413 = vlaneseq
    %v414 = vshrl.u32 %v413, 7
    %v415 = vsub.s32 %v412, %v414
    %v416 = vrot.slane %v408, %v415
    %v418 = vunpack.c.l.s4 1934713408
    %v419 = vunpack.c.0.s8 %v418
    %v420 = vlaneseq
    %v421 = vshrl.u32 %v420, 7
    %v422 = vsub.s32 %v419, %v421
    %v423 = vrot.slane %v409, %v422
    %v424 = vcombine.low %v391, %v407
    %v425 = vcombine.high %v391, %v407
    %v427 = vunpack.c.l.s4 1934713408
    %v428 = vunpack.c.0.s8 %v427
    %v429 = vlaneseq
    %v430 = vshrl.u32 %v429, 7
    %v431 = vsub.s32 %v428, %v430
    %v432 = vrot.slane %v424, %v431
    %v434 = vunpack.c.l.s4 1934713408
    %v435 = vunpack.c.0.s8 %v434
    %v436 = vlaneseq
    %v437 = vshrl.u32 %v436, 7
    %v438 = vsub.s32 %v435, %v437
    %v439 = vrot.slane %v425, %v438
    %v440 = vcombine.high %v416, 0.0
    %v441 = vcombine.high %v423, 0.0
    %v442 = vcombine.high %v432, 0.0
    %v443 = vcombine.high %v439, 0.0
    %v444 = vcombine.low %v348, %v355
    %v446 = vunpack.c.l.s4 1983009808
    %v447 = vunpack.c.0.s8 %v446
    %v448 = vlaneseq
    %v449 = vshrl.u32 %v448, 7
    %v450 = vsub.s32 %v447, %v449
    %v451 = vrot.slane %v444, %v450
    %v452 = vcombine.low %v372, %v373
    %v454 = vunpack.c.l.s4 1983009808
    %v455 = vunpack.c.0.s8 %v454
    %v456 = vlaneseq
    %v457 = vshrl.u32 %v456, 7
    %v458 = vsub.s32 %v455, %v457
    %v459 = vrot.slane %v452, %v458
    %v460 = vcombine.low %v364, %v371
    %v462 = vunpack.c.l.s4 1983009808
    %v463 = vunpack.c.0.s8 %v462
    %v464 = vlaneseq
    %v465 = vshrl.u32 %v464, 7
    %v466 = vsub.s32 %v463, %v465
    %v467 = vrot.slane %v460, %v466
    %v468 = vcombine.low %v374, %v375
    %v470 = vunpack.c.l.s4 1983009808
    %v471 = vunpack.c.0.s8 %v470
    %v472 = vlaneseq
    %v473 = vshrl.u32 %v472, 7
    %v474 = vsub.s32 %v471, %v473
    %v475 = vrot.slane %v468, %v474
    %v476 = vcombine.low %v451, %v459
    %v477 = vcombine.high %v451, %v459
    %v479 = vunpack.c.l.s4 1934713408
    %v480 = vunpack.c.0.s8 %v479
    %v481 = vlaneseq
    %v482 = vshrl.u32 %v481, 7
    %v483 = vsub.s32 %v480, %v482
    %v484 = vrot.slane %v476, %v483
    %v486 = vunpack.c.l.s4 1934713408
    %v487 = vunpack.c.0.s8 %v486
    %v488 = vlaneseq
    %v489 = vshrl.u32 %v488, 7
    %v490 = vsub.s32 %v487, %v489
    %v491 = vrot.slane %v477, %v490
    %v492 = vcombine.low %v467, %v475
    %v493 = vcombine.high %v467, %v475
    %v495 = vunpack.c.l.s4 1934713408
    %v496 = vunpack.c.0.s8 %v495
    %v497 = vlaneseq
    %v498 = vshrl.u32 %v497, 7
    %v499 = vsub.s32 %v496, %v498
    %v500 = vrot.slane %v492, %v499
    %v502 = vunpack.c.l.s4 1934713408
    %v503 = vunpack.c.0.s8 %v502
    %v504 = vlaneseq
    %v505 = vshrl.u32 %v504, 7
    %v506 = vsub.s32 %v503, %v505
    %v507 = vrot.slane %v493, %v506
    %v508 = vcombine.low %v484, %v500
    %v509 = vcombine.high %v484, %v500
    %v510 = vcombine.low %v491, %v507
    %v511 = vcombine.high %v491, %v507
    %v512 = vcombine.low %v416, %v423
    %v514 = vunpack.c.l.s4 1983009808
    %v515 = vunpack.c.0.s8 %v514
    %v516 = vlaneseq
    %v517 = vshrl.u32 %v516, 7
    %v518 = vsub.s32 %v515, %v517
    %v519 = vrot.slane %v512, %v518
    %v520 = vcombine.low %v440, %v441
    %v522 = vunpack.c.l.s4 1983009808
    %v523 = vunpack.c.0.s8 %v522
    %v524 = vlaneseq
    %v525 = vshrl.u32 %v524, 7
    %v526 = vsub.s32 %v523, %v525
    %v527 = vrot.slane %v520, %v526
    %v528 = vcombine.low %v432, %v439
    %v530 = vunpack.c.l.s4 1983009808
    %v531 = vunpack.c.0.s8 %v530
    %v532 = vlaneseq
    %v533 = vshrl.u32 %v532, 7
    %v534 = vsub.s32 %v531, %v533
    %v535 = vrot.slane %v528, %v534
    %v536 = vcombine.low %v442, %v443
    %v538 = vunpack.c.l.s4 1983009808
    %v539 = vunpack.c.0.s8 %v538
    %v540 = vlaneseq
    %v541 = vshrl.u32 %v540, 7
    %v542 = vsub.s32 %v539, %v541
    %v543 = vrot.slane %v536, %v542
    %v544 = vcombine.low %v519, %v527
    %v545 = vcombine.high %v519, %v527
    %v547 = vunpack.c.l.s4 1934713408
    %v548 = vunpack.c.0.s8 %v547
    %v549 = vlaneseq
    %v550 = vshrl.u32 %v549, 7
    %v551 = vsub.s32 %v548, %v550
    %v552 = vrot.slane %v544, %v551
    %v554 = vunpack.c.l.s4 1934713408
    %v555 = vunpack.c.0.s8 %v554
    %v556 = vlaneseq
    %v557 = vshrl.u32 %v556, 7
    %v558 = vsub.s32 %v555, %v557
    %v559 = vrot.slane %v545, %v558
    %v560 = vcombine.low %v535, %v543
    %v561 = vcombine.high %v535, %v543
    %v563 = vunpack.c.l.s4 1934713408
    %v564 = vunpack.c.0.s8 %v563
    %v565 = vlaneseq
    %v566 = vshrl.u32 %v565, 7
    %v567 = vsub.s32 %v564, %v566
    %v568 = vrot.slane %v560, %v567
    %v570 = vunpack.c.l.s4 1934713408
    %v571 = vunpack.c.0.s8 %v570
    %v572 = vlaneseq
    %v573 = vshrl.u32 %v572, 7
    %v574 = vsub.s32 %v571, %v573
    %v575 = vrot.slane %v561, %v574
    %v576 = vcombine.low %v552, %v568
    %v577 = vcombine.high %v552, %v568
    %v578 = vcombine.low %v559, %v575
    %v579 = vcombine.high %v559, %v575
    %582 = vrot.lane.b32.xlu0 %v280, 120
    %v583 = vpop.permute.xlu0 %582
    %584 = vrot.lane.b32.xlu0 %v281, 120
    %v585 = vpop.permute.xlu0 %584
    %588 = vrot.lane.b32.xlu0 %v280, 112
    %v589 = vpop.permute.xlu0 %588
    %590 = vrot.lane.b32.xlu0 %v281, 112
    %v591 = vpop.permute.xlu0 %590
    %594 = vrot.lane.b32.xlu0 %v280, 104
    %v595 = vpop.permute.xlu0 %594
    %596 = vrot.lane.b32.xlu0 %v281, 104
    %v597 = vpop.permute.xlu0 %596
    %v600 = vcombine.low %v280, %v589
    %v601 = vcombine.high %v280, %v589
    %v603 = vunpack.c.l.s4 1983009808
    %v604 = vunpack.c.0.s8 %v603
    %v605 = vlaneseq
    %v606 = vshrl.u32 %v605, 7
    %v607 = vsub.s32 %v604, %v606
    %v608 = vrot.slane %v600, %v607
    %v610 = vunpack.c.l.s4 1983009808
    %v611 = vunpack.c.0.s8 %v610
    %v612 = vlaneseq
    %v613 = vshrl.u32 %v612, 7
    %v614 = vsub.s32 %v611, %v613
    %v615 = vrot.slane %v601, %v614
    %v616 = vcombine.low %v583, %v595
    %v617 = vcombine.high %v583, %v595
    %v619 = vunpack.c.l.s4 1983009808
    %v620 = vunpack.c.0.s8 %v619
    %v621 = vlaneseq
    %v622 = vshrl.u32 %v621, 7
    %v623 = vsub.s32 %v620, %v622
    %v624 = vrot.slane %v616, %v623
    %v626 = vunpack.c.l.s4 1983009808
    %v627 = vunpack.c.0.s8 %v626
    %v628 = vlaneseq
    %v629 = vshrl.u32 %v628, 7
    %v630 = vsub.s32 %v627, %v629
    %v631 = vrot.slane %v617, %v630
    %v632 = vcombine.low %v608, %v624
    %v633 = vcombine.high %v608, %v624
    %v635 = vunpack.c.l.s4 1934713408
    %v636 = vunpack.c.0.s8 %v635
    %v637 = vlaneseq
    %v638 = vshrl.u32 %v637, 7
    %v639 = vsub.s32 %v636, %v638
    %v640 = vrot.slane %v632, %v639
    %v642 = vunpack.c.l.s4 1934713408
    %v643 = vunpack.c.0.s8 %v642
    %v644 = vlaneseq
    %v645 = vshrl.u32 %v644, 7
    %v646 = vsub.s32 %v643, %v645
    %v647 = vrot.slane %v633, %v646
    %v648 = vcombine.low %v615, %v631
    %v649 = vcombine.high %v615, %v631
    %v651 = vunpack.c.l.s4 1934713408
    %v652 = vunpack.c.0.s8 %v651
    %v653 = vlaneseq
    %v654 = vshrl.u32 %v653, 7
    %v655 = vsub.s32 %v652, %v654
    %v656 = vrot.slane %v648, %v655
    %v658 = vunpack.c.l.s4 1934713408
    %v659 = vunpack.c.0.s8 %v658
    %v660 = vlaneseq
    %v661 = vshrl.u32 %v660, 7
    %v662 = vsub.s32 %v659, %v661
    %v663 = vrot.slane %v649, %v662
    %v664 = vcombine.high %v640, 0.0
    %v665 = vcombine.high %v647, 0.0
    %v666 = vcombine.high %v656, 0.0
    %v667 = vcombine.high %v663, 0.0
    %v668 = vcombine.low %v281, %v591
    %v669 = vcombine.high %v281, %v591
    %v671 = vunpack.c.l.s4 1983009808
    %v672 = vunpack.c.0.s8 %v671
    %v673 = vlaneseq
    %v674 = vshrl.u32 %v673, 7
    %v675 = vsub.s32 %v672, %v674
    %v676 = vrot.slane %v668, %v675
    %v678 = vunpack.c.l.s4 1983009808
    %v679 = vunpack.c.0.s8 %v678
    %v680 = vlaneseq
    %v681 = vshrl.u32 %v680, 7
    %v682 = vsub.s32 %v679, %v681
    %v683 = vrot.slane %v669, %v682
    %v684 = vcombine.low %v585, %v597
    %v685 = vcombine.high %v585, %v597
    %v687 = vunpack.c.l.s4 1983009808
    %v688 = vunpack.c.0.s8 %v687
    %v689 = vlaneseq
    %v690 = vshrl.u32 %v689, 7
    %v691 = vsub.s32 %v688, %v690
    %v692 = vrot.slane %v684, %v691
    %v694 = vunpack.c.l.s4 1983009808
    %v695 = vunpack.c.0.s8 %v694
    %v696 = vlaneseq
    %v697 = vshrl.u32 %v696, 7
    %v698 = vsub.s32 %v695, %v697
    %v699 = vrot.slane %v685, %v698
    %v700 = vcombine.low %v676, %v692
    %v701 = vcombine.high %v676, %v692
    %v703 = vunpack.c.l.s4 1934713408
    %v704 = vunpack.c.0.s8 %v703
    %v705 = vlaneseq
    %v706 = vshrl.u32 %v705, 7
    %v707 = vsub.s32 %v704, %v706
    %v708 = vrot.slane %v700, %v707
    %v710 = vunpack.c.l.s4 1934713408
    %v711 = vunpack.c.0.s8 %v710
    %v712 = vlaneseq
    %v713 = vshrl.u32 %v712, 7
    %v714 = vsub.s32 %v711, %v713
    %v715 = vrot.slane %v701, %v714
    %v716 = vcombine.low %v683, %v699
    %v717 = vcombine.high %v683, %v699
    %v719 = vunpack.c.l.s4 1934713408
    %v720 = vunpack.c.0.s8 %v719
    %v721 = vlaneseq
    %v722 = vshrl.u32 %v721, 7
    %v723 = vsub.s32 %v720, %v722
    %v724 = vrot.slane %v716, %v723
    %v726 = vunpack.c.l.s4 1934713408
    %v727 = vunpack.c.0.s8 %v726
    %v728 = vlaneseq
    %v729 = vshrl.u32 %v728, 7
    %v730 = vsub.s32 %v727, %v729
    %v731 = vrot.slane %v717, %v730
    %v732 = vcombine.high %v708, 0.0
    %v733 = vcombine.high %v715, 0.0
    %v734 = vcombine.high %v724, 0.0
    %v735 = vcombine.high %v731, 0.0
    %v736 = vcombine.low %v640, %v647
    %v738 = vunpack.c.l.s4 1983009808
    %v739 = vunpack.c.0.s8 %v738
    %v740 = vlaneseq
    %v741 = vshrl.u32 %v740, 7
    %v742 = vsub.s32 %v739, %v741
    %v743 = vrot.slane %v736, %v742
    %v744 = vcombine.low %v664, %v665
    %v746 = vunpack.c.l.s4 1983009808
    %v747 = vunpack.c.0.s8 %v746
    %v748 = vlaneseq
    %v749 = vshrl.u32 %v748, 7
    %v750 = vsub.s32 %v747, %v749
    %v751 = vrot.slane %v744, %v750
    %v752 = vcombine.low %v656, %v663
    %v754 = vunpack.c.l.s4 1983009808
    %v755 = vunpack.c.0.s8 %v754
    %v756 = vlaneseq
    %v757 = vshrl.u32 %v756, 7
    %v758 = vsub.s32 %v755, %v757
    %v759 = vrot.slane %v752, %v758
    %v760 = vcombine.low %v666, %v667
    %v762 = vunpack.c.l.s4 1983009808
    %v763 = vunpack.c.0.s8 %v762
    %v764 = vlaneseq
    %v765 = vshrl.u32 %v764, 7
    %v766 = vsub.s32 %v763, %v765
    %v767 = vrot.slane %v760, %v766
    %v768 = vcombine.low %v743, %v751
    %v769 = vcombine.high %v743, %v751
    %v771 = vunpack.c.l.s4 1934713408
    %v772 = vunpack.c.0.s8 %v771
    %v773 = vlaneseq
    %v774 = vshrl.u32 %v773, 7
    %v775 = vsub.s32 %v772, %v774
    %v776 = vrot.slane %v768, %v775
    %v778 = vunpack.c.l.s4 1934713408
    %v779 = vunpack.c.0.s8 %v778
    %v780 = vlaneseq
    %v781 = vshrl.u32 %v780, 7
    %v782 = vsub.s32 %v779, %v781
    %v783 = vrot.slane %v769, %v782
    %v784 = vcombine.low %v759, %v767
    %v785 = vcombine.high %v759, %v767
    %v787 = vunpack.c.l.s4 1934713408
    %v788 = vunpack.c.0.s8 %v787
    %v789 = vlaneseq
    %v790 = vshrl.u32 %v789, 7
    %v791 = vsub.s32 %v788, %v790
    %v792 = vrot.slane %v784, %v791
    %v794 = vunpack.c.l.s4 1934713408
    %v795 = vunpack.c.0.s8 %v794
    %v796 = vlaneseq
    %v797 = vshrl.u32 %v796, 7
    %v798 = vsub.s32 %v795, %v797
    %v799 = vrot.slane %v785, %v798
    %v800 = vcombine.low %v776, %v792
    %v801 = vcombine.high %v776, %v792
    %v802 = vcombine.low %v783, %v799
    %v803 = vcombine.high %v783, %v799
    %v804 = vcombine.low %v708, %v715
    %v806 = vunpack.c.l.s4 1983009808
    %v807 = vunpack.c.0.s8 %v806
    %v808 = vlaneseq
    %v809 = vshrl.u32 %v808, 7
    %v810 = vsub.s32 %v807, %v809
    %v811 = vrot.slane %v804, %v810
    %v812 = vcombine.low %v732, %v733
    %v814 = vunpack.c.l.s4 1983009808
    %v815 = vunpack.c.0.s8 %v814
    %v816 = vlaneseq
    %v817 = vshrl.u32 %v816, 7
    %v818 = vsub.s32 %v815, %v817
    %v819 = vrot.slane %v812, %v818
    %v820 = vcombine.low %v724, %v731
    %v822 = vunpack.c.l.s4 1983009808
    %v823 = vunpack.c.0.s8 %v822
    %v824 = vlaneseq
    %v825 = vshrl.u32 %v824, 7
    %v826 = vsub.s32 %v823, %v825
    %v827 = vrot.slane %v820, %v826
    %v828 = vcombine.low %v734, %v735
    %v830 = vunpack.c.l.s4 1983009808
    %v831 = vunpack.c.0.s8 %v830
    %v832 = vlaneseq
    %v833 = vshrl.u32 %v832, 7
    %v834 = vsub.s32 %v831, %v833
    %v835 = vrot.slane %v828, %v834
    %v836 = vcombine.low %v811, %v819
    %v837 = vcombine.high %v811, %v819
    %v839 = vunpack.c.l.s4 1934713408
    %v840 = vunpack.c.0.s8 %v839
    %v841 = vlaneseq
    %v842 = vshrl.u32 %v841, 7
    %v843 = vsub.s32 %v840, %v842
    %v844 = vrot.slane %v836, %v843
    %v846 = vunpack.c.l.s4 1934713408
    %v847 = vunpack.c.0.s8 %v846
    %v848 = vlaneseq
    %v849 = vshrl.u32 %v848, 7
    %v850 = vsub.s32 %v847, %v849
    %v851 = vrot.slane %v837, %v850
    %v852 = vcombine.low %v827, %v835
    %v853 = vcombine.high %v827, %v835
    %v855 = vunpack.c.l.s4 1934713408
    %v856 = vunpack.c.0.s8 %v855
    %v857 = vlaneseq
    %v858 = vshrl.u32 %v857, 7
    %v859 = vsub.s32 %v856, %v858
    %v860 = vrot.slane %v852, %v859
    %v862 = vunpack.c.l.s4 1934713408
    %v863 = vunpack.c.0.s8 %v862
    %v864 = vlaneseq
    %v865 = vshrl.u32 %v864, 7
    %v866 = vsub.s32 %v863, %v865
    %v867 = vrot.slane %v853, %v866
    %v868 = vcombine.low %v844, %v860
    %v869 = vcombine.high %v844, %v860
    %v870 = vcombine.low %v851, %v867
    %v871 = vcombine.high %v851, %v867
    %874 = vrot.lane.b32.xlu0 %v286, 120
    %v875 = vpop.permute.xlu0 %874
    %876 = vrot.lane.b32.xlu0 %v287, 120
    %v877 = vpop.permute.xlu0 %876
    %880 = vrot.lane.b32.xlu0 %v286, 112
    %v881 = vpop.permute.xlu0 %880
    %882 = vrot.lane.b32.xlu0 %v287, 112
    %v883 = vpop.permute.xlu0 %882
    %886 = vrot.lane.b32.xlu0 %v286, 104
    %v887 = vpop.permute.xlu0 %886
    %888 = vrot.lane.b32.xlu0 %v287, 104
    %v889 = vpop.permute.xlu0 %888
    %v892 = vcombine.low %v286, %v881
    %v893 = vcombine.high %v286, %v881
    %v895 = vunpack.c.l.s4 1983009808
    %v896 = vunpack.c.0.s8 %v895
    %v897 = vlaneseq
    %v898 = vshrl.u32 %v897, 7
    %v899 = vsub.s32 %v896, %v898
    %v900 = vrot.slane %v892, %v899
    %v902 = vunpack.c.l.s4 1983009808
    %v903 = vunpack.c.0.s8 %v902
    %v904 = vlaneseq
    %v905 = vshrl.u32 %v904, 7
    %v906 = vsub.s32 %v903, %v905
    %v907 = vrot.slane %v893, %v906
    %v908 = vcombine.low %v875, %v887
    %v909 = vcombine.high %v875, %v887
    %v911 = vunpack.c.l.s4 1983009808
    %v912 = vunpack.c.0.s8 %v911
    %v913 = vlaneseq
    %v914 = vshrl.u32 %v913, 7
    %v915 = vsub.s32 %v912, %v914
    %v916 = vrot.slane %v908, %v915
    %v918 = vunpack.c.l.s4 1983009808
    %v919 = vunpack.c.0.s8 %v918
    %v920 = vlaneseq
    %v921 = vshrl.u32 %v920, 7
    %v922 = vsub.s32 %v919, %v921
    %v923 = vrot.slane %v909, %v922
    %v924 = vcombine.low %v900, %v916
    %v925 = vcombine.high %v900, %v916
    %v927 = vunpack.c.l.s4 1934713408
    %v928 = vunpack.c.0.s8 %v927
    %v929 = vlaneseq
    %v930 = vshrl.u32 %v929, 7
    %v931 = vsub.s32 %v928, %v930
    %v932 = vrot.slane %v924, %v931
    %v934 = vunpack.c.l.s4 1934713408
    %v935 = vunpack.c.0.s8 %v934
    %v936 = vlaneseq
    %v937 = vshrl.u32 %v936, 7
    %v938 = vsub.s32 %v935, %v937
    %v939 = vrot.slane %v925, %v938
    %v940 = vcombine.low %v907, %v923
    %v941 = vcombine.high %v907, %v923
    %v943 = vunpack.c.l.s4 1934713408
    %v944 = vunpack.c.0.s8 %v943
    %v945 = vlaneseq
    %v946 = vshrl.u32 %v945, 7
    %v947 = vsub.s32 %v944, %v946
    %v948 = vrot.slane %v940, %v947
    %v950 = vunpack.c.l.s4 1934713408
    %v951 = vunpack.c.0.s8 %v950
    %v952 = vlaneseq
    %v953 = vshrl.u32 %v952, 7
    %v954 = vsub.s32 %v951, %v953
    %v955 = vrot.slane %v941, %v954
    %v956 = vcombine.high %v932, 0.0
    %v957 = vcombine.high %v939, 0.0
    %v958 = vcombine.high %v948, 0.0
    %v959 = vcombine.high %v955, 0.0
    %v960 = vcombine.low %v287, %v883
    %v961 = vcombine.high %v287, %v883
    %v963 = vunpack.c.l.s4 1983009808
    %v964 = vunpack.c.0.s8 %v963
    %v965 = vlaneseq
    %v966 = vshrl.u32 %v965, 7
    %v967 = vsub.s32 %v964, %v966
    %v968 = vrot.slane %v960, %v967
    %v970 = vunpack.c.l.s4 1983009808
    %v971 = vunpack.c.0.s8 %v970
    %v972 = vlaneseq
    %v973 = vshrl.u32 %v972, 7
    %v974 = vsub.s32 %v971, %v973
    %v975 = vrot.slane %v961, %v974
    %v976 = vcombine.low %v877, %v889
    %v977 = vcombine.high %v877, %v889
    %v979 = vunpack.c.l.s4 1983009808
    %v980 = vunpack.c.0.s8 %v979
    %v981 = vlaneseq
    %v982 = vshrl.u32 %v981, 7
    %v983 = vsub.s32 %v980, %v982
    %v984 = vrot.slane %v976, %v983
    %v986 = vunpack.c.l.s4 1983009808
    %v987 = vunpack.c.0.s8 %v986
    %v988 = vlaneseq
    %v989 = vshrl.u32 %v988, 7
    %v990 = vsub.s32 %v987, %v989
    %v991 = vrot.slane %v977, %v990
    %v992 = vcombine.low %v968, %v984
    %v993 = vcombine.high %v968, %v984
    %v995 = vunpack.c.l.s4 1934713408
    %v996 = vunpack.c.0.s8 %v995
    %v997 = vlaneseq
    %v998 = vshrl.u32 %v997, 7
    %v999 = vsub.s32 %v996, %v998
    %v1000 = vrot.slane %v992, %v999
    %v1002 = vunpack.c.l.s4 1934713408
    %v1003 = vunpack.c.0.s8 %v1002
    %v1004 = vlaneseq
    %v1005 = vshrl.u32 %v1004, 7
    %v1006 = vsub.s32 %v1003, %v1005
    %v1007 = vrot.slane %v993, %v1006
    %v1008 = vcombine.low %v975, %v991
    %v1009 = vcombine.high %v975, %v991
    %v1011 = vunpack.c.l.s4 1934713408
    %v1012 = vunpack.c.0.s8 %v1011
    %v1013 = vlaneseq
    %v1014 = vshrl.u32 %v1013, 7
    %v1015 = vsub.s32 %v1012, %v1014
    %v1016 = vrot.slane %v1008, %v1015
    %v1018 = vunpack.c.l.s4 1934713408
    %v1019 = vunpack.c.0.s8 %v1018
    %v1020 = vlaneseq
    %v1021 = vshrl.u32 %v1020, 7
    %v1022 = vsub.s32 %v1019, %v1021
    %v1023 = vrot.slane %v1009, %v1022
    %v1024 = vcombine.high %v1000, 0.0
    %v1025 = vcombine.high %v1007, 0.0
    %v1026 = vcombine.high %v1016, 0.0
    %v1027 = vcombine.high %v1023, 0.0
    %v1028 = vcombine.low %v932, %v939
    %v1030 = vunpack.c.l.s4 1983009808
    %v1031 = vunpack.c.0.s8 %v1030
    %v1032 = vlaneseq
    %v1033 = vshrl.u32 %v1032, 7
    %v1034 = vsub.s32 %v1031, %v1033
    %v1035 = vrot.slane %v1028, %v1034
    %v1036 = vcombine.low %v956, %v957
    %v1038 = vunpack.c.l.s4 1983009808
    %v1039 = vunpack.c.0.s8 %v1038
    %v1040 = vlaneseq
    %v1041 = vshrl.u32 %v1040, 7
    %v1042 = vsub.s32 %v1039, %v1041
    %v1043 = vrot.slane %v1036, %v1042
    %v1044 = vcombine.low %v948, %v955
    %v1046 = vunpack.c.l.s4 1983009808
    %v1047 = vunpack.c.0.s8 %v1046
    %v1048 = vlaneseq
    %v1049 = vshrl.u32 %v1048, 7
    %v1050 = vsub.s32 %v1047, %v1049
    %v1051 = vrot.slane %v1044, %v1050
    %v1052 = vcombine.low %v958, %v959
    %v1054 = vunpack.c.l.s4 1983009808
    %v1055 = vunpack.c.0.s8 %v1054
    %v1056 = vlaneseq
    %v1057 = vshrl.u32 %v1056, 7
    %v1058 = vsub.s32 %v1055, %v1057
    %v1059 = vrot.slane %v1052, %v1058
    %v1060 = vcombine.low %v1035, %v1043
    %v1061 = vcombine.high %v1035, %v1043
    %v1063 = vunpack.c.l.s4 1934713408
    %v1064 = vunpack.c.0.s8 %v1063
    %v1065 = vlaneseq
    %v1066 = vshrl.u32 %v1065, 7
    %v1067 = vsub.s32 %v1064, %v1066
    %v1068 = vrot.slane %v1060, %v1067
    %v1070 = vunpack.c.l.s4 1934713408
    %v1071 = vunpack.c.0.s8 %v1070
    %v1072 = vlaneseq
    %v1073 = vshrl.u32 %v1072, 7
    %v1074 = vsub.s32 %v1071, %v1073
    %v1075 = vrot.slane %v1061, %v1074
    %v1076 = vcombine.low %v1051, %v1059
    %v1077 = vcombine.high %v1051, %v1059
    %v1079 = vunpack.c.l.s4 1934713408
    %v1080 = vunpack.c.0.s8 %v1079
    %v1081 = vlaneseq
    %v1082 = vshrl.u32 %v1081, 7
    %v1083 = vsub.s32 %v1080, %v1082
    %v1084 = vrot.slane %v1076, %v1083
    %v1086 = vunpack.c.l.s4 1934713408
    %v1087 = vunpack.c.0.s8 %v1086
    %v1088 = vlaneseq
    %v1089 = vshrl.u32 %v1088, 7
    %v1090 = vsub.s32 %v1087, %v1089
    %v1091 = vrot.slane %v1077, %v1090
    %v1092 = vcombine.low %v1068, %v1084
    %v1093 = vcombine.high %v1068, %v1084
    %v1094 = vcombine.low %v1075, %v1091
    %v1095 = vcombine.high %v1075, %v1091
    %v1096 = vcombine.low %v1000, %v1007
    %v1098 = vunpack.c.l.s4 1983009808
    %v1099 = vunpack.c.0.s8 %v1098
    %v1100 = vlaneseq
    %v1101 = vshrl.u32 %v1100, 7
    %v1102 = vsub.s32 %v1099, %v1101
    %v1103 = vrot.slane %v1096, %v1102
    %v1104 = vcombine.low %v1024, %v1025
    %v1106 = vunpack.c.l.s4 1983009808
    %v1107 = vunpack.c.0.s8 %v1106
    %v1108 = vlaneseq
    %v1109 = vshrl.u32 %v1108, 7
    %v1110 = vsub.s32 %v1107, %v1109
    %v1111 = vrot.slane %v1104, %v1110
    %v1112 = vcombine.low %v1016, %v1023
    %v1114 = vunpack.c.l.s4 1983009808
    %v1115 = vunpack.c.0.s8 %v1114
    %v1116 = vlaneseq
    %v1117 = vshrl.u32 %v1116, 7
    %v1118 = vsub.s32 %v1115, %v1117
    %v1119 = vrot.slane %v1112, %v1118
    %v1120 = vcombine.low %v1026, %v1027
    %v1122 = vunpack.c.l.s4 1983009808
    %v1123 = vunpack.c.0.s8 %v1122
    %v1124 = vlaneseq
    %v1125 = vshrl.u32 %v1124, 7
    %v1126 = vsub.s32 %v1123, %v1125
    %v1127 = vrot.slane %v1120, %v1126
    %v1128 = vcombine.low %v1103, %v1111
    %v1129 = vcombine.high %v1103, %v1111
    %v1131 = vunpack.c.l.s4 1934713408
    %v1132 = vunpack.c.0.s8 %v1131
    %v1133 = vlaneseq
    %v1134 = vshrl.u32 %v1133, 7
    %v1135 = vsub.s32 %v1132, %v1134
    %v1136 = vrot.slane %v1128, %v1135
    %v1138 = vunpack.c.l.s4 1934713408
    %v1139 = vunpack.c.0.s8 %v1138
    %v1140 = vlaneseq
    %v1141 = vshrl.u32 %v1140, 7
    %v1142 = vsub.s32 %v1139, %v1141
    %v1143 = vrot.slane %v1129, %v1142
    %v1144 = vcombine.low %v1119, %v1127
    %v1145 = vcombine.high %v1119, %v1127
    %v1147 = vunpack.c.l.s4 1934713408
    %v1148 = vunpack.c.0.s8 %v1147
    %v1149 = vlaneseq
    %v1150 = vshrl.u32 %v1149, 7
    %v1151 = vsub.s32 %v1148, %v1150
    %v1152 = vrot.slane %v1144, %v1151
    %v1154 = vunpack.c.l.s4 1934713408
    %v1155 = vunpack.c.0.s8 %v1154
    %v1156 = vlaneseq
    %v1157 = vshrl.u32 %v1156, 7
    %v1158 = vsub.s32 %v1155, %v1157
    %v1159 = vrot.slane %v1145, %v1158
    %v1160 = vcombine.low %v1136, %v1152
    %v1161 = vcombine.high %v1136, %v1152
    %v1162 = vcombine.low %v1143, %v1159
    %v1163 = vcombine.high %v1143, %v1159
    %vm1164 = vcmask 64512
    %v1166 = vsel %vm1164, %v508, 0
    %v1169 = vsel %vm1164, %v800, 0
    %1171 = vmatprep.subr.mxu0 0.0
    %1172 = vmatpush1.xpose.msra.mxu0 %v1169
    %1173 = vmatprep.subr.mxu0 0.0
    %1174 = vmatpush1.xpose.msra.mxu0 0.0
    %1175 = vmatprep.subr.mxu0 0.0
    %1176 = vmatpush1.xpose.msra.mxu0 0.0
    %1177 = vmatprep.subr.mxu0 0.0
    %1178 = vmatpush1.xpose.msra.mxu0 0.0
    %1179 = vmatprep.subr.mxu0 0.0
    %1180 = vmatpush1.xpose.msra.mxu0 0.0
    %1181 = vmatprep.subr.mxu0 0.0
    %1182 = vmatpush1.xpose.msra.mxu0 0.0
    %1183 = vmatprep.subr.mxu0 0.0
    %1184 = vmatpush1.xpose.msra.mxu0 0.0
    %1185 = vmatprep.subr.mxu0 0.0
    %1186 = vmatpush1.xpose.msra.mxu0 0.0
    %1187 = vmatprep.subr.mxu0 0.0
    %1188 = vmatpush1.xpose.msra.mxu0 0.0
    %1189 = vmatprep.subr.mxu0 0.0
    %1190 = vmatpush1.xpose.msra.mxu0 0.0
    %1191 = vmatprep.subr.mxu0 0.0
    %1192 = vmatpush1.xpose.msra.mxu0 0.0
    %1193 = vmatprep.subr.mxu0 0.0
    %1194 = vmatpush1.xpose.msra.mxu0 0.0
    %1195 = vmatprep.subr.mxu0 0.0
    %1196 = vmatpush1.xpose.msra.mxu0 0.0
    %1197 = vmatprep.subr.mxu0 0.0
    %1198 = vmatpush1.xpose.msra.mxu0 0.0
    %1199 = vmatprep.subr.mxu0 0.0
    %1200 = vmatpush1.xpose.msra.mxu0 0.0
    %1201 = vmatprep.subr.mxu0 0.0
    %1202 = vmatpush1.xpose.msra.mxu0 0.0
    %1203 = vmatprep.subr.mxu0 0.0
    %1204 = vmatpush1.xpose.msra.mxu0 0.0
    %1205 = vmatprep.subr.mxu0 0.0
    %1206 = vmatpush1.xpose.msra.mxu0 0.0
    %1207 = vmatprep.subr.mxu0 0.0
    %1208 = vmatpush1.xpose.msra.mxu0 0.0
    %1209 = vmatprep.subr.mxu0 0.0
    %1210 = vmatpush1.xpose.msra.mxu0 0.0
    %1211 = vmatprep.subr.mxu0 0.0
    %1212 = vmatpush1.xpose.msra.mxu0 0.0
    %1213 = vmatprep.subr.mxu0 0.0
    %1214 = vmatpush1.xpose.msra.mxu0 0.0
    %1215 = vmatprep.subr.mxu0 0.0
    %1216 = vmatpush1.xpose.msra.mxu0 0.0
    %1217 = vmatprep.subr.mxu0 0.0
    %1218 = vmatpush1.xpose.msra.mxu0 0.0
    %1219 = vmatprep.subr.mxu0 0.0
    %1220 = vmatpush1.xpose.msra.mxu0 0.0
    %1221 = vmatprep.subr.mxu0 0.0
    %1222 = vmatpush1.xpose.msra.mxu0 0.0
    %1223 = vmatprep.subr.mxu0 0.0
    %1224 = vmatpush1.xpose.msra.mxu0 0.0
    %1225 = vmatprep.subr.mxu0 0.0
    %1226 = vmatpush1.xpose.msra.mxu0 0.0
    %1227 = vmatprep.subr.mxu0 0.0
    %1228 = vmatpush1.xpose.msra.mxu0 0.0
    %1229 = vmatprep.subr.mxu0 0.0
    %1230 = vmatpush1.xpose.msra.mxu0 0.0
    %1231 = vmatprep.subr.mxu0 0.0
    %1232 = vmatpush1.xpose.msra.mxu0 0.0
    %1233 = vmatprep.subr.mxu0 0.0
    %1234 = vmatpush1.xpose.msra.mxu0 0.0
    %1235 = vmatprep.mubr.f32.mxu0 0.0
    %1236 = vmatmul.mubr.f32.gmra.mrb[0].mxu0 %v1166
    %v1237 = vpop.f32.mrb[0].mxu0
    %v1238 = vadd.f32 0.0, %v1237
    %v1239 = vpop.f32.mrb[0].mxu0
    %1240 = vdwg.mxu0
    %v1242 = vsel %vm1164, %v509, 0
    %v1245 = vsel %vm1164, %v801, 0
    %1247 = vmatprep.subr.mxu0 0.0
    %1248 = vmatpush1.xpose.msra.mxu0 %v1245
    %1249 = vmatprep.subr.mxu0 0.0
    %1250 = vmatpush1.xpose.msra.mxu0 0.0
    %1251 = vmatprep.subr.mxu0 0.0
    %1252 = vmatpush1.xpose.msra.mxu0 0.0
    %1253 = vmatprep.subr.mxu0 0.0
    %1254 = vmatpush1.xpose.msra.mxu0 0.0
    %1255 = vmatprep.subr.mxu0 0.0
    %1256 = vmatpush1.xpose.msra.mxu0 0.0
    %1257 = vmatprep.subr.mxu0 0.0
    %1258 = vmatpush1.xpose.msra.mxu0 0.0
    %1259 = vmatprep.subr.mxu0 0.0
    %1260 = vmatpush1.xpose.msra.mxu0 0.0
    %1261 = vmatprep.subr.mxu0 0.0
    %1262 = vmatpush1.xpose.msra.mxu0 0.0
    %1263 = vmatprep.subr.mxu0 0.0
    %1264 = vmatpush1.xpose.msra.mxu0 0.0
    %1265 = vmatprep.subr.mxu0 0.0
    %1266 = vmatpush1.xpose.msra.mxu0 0.0
    %1267 = vmatprep.subr.mxu0 0.0
    %1268 = vmatpush1.xpose.msra.mxu0 0.0
    %1269 = vmatprep.subr.mxu0 0.0
    %1270 = vmatpush1.xpose.msra.mxu0 0.0
    %1271 = vmatprep.subr.mxu0 0.0
    %1272 = vmatpush1.xpose.msra.mxu0 0.0
    %1273 = vmatprep.subr.mxu0 0.0
    %1274 = vmatpush1.xpose.msra.mxu0 0.0
    %1275 = vmatprep.subr.mxu0 0.0
    %1276 = vmatpush1.xpose.msra.mxu0 0.0
    %1277 = vmatprep.subr.mxu0 0.0
    %1278 = vmatpush1.xpose.msra.mxu0 0.0
    %1279 = vmatprep.subr.mxu0 0.0
    %1280 = vmatpush1.xpose.msra.mxu0 0.0
    %1281 = vmatprep.subr.mxu0 0.0
    %1282 = vmatpush1.xpose.msra.mxu0 0.0
    %1283 = vmatprep.subr.mxu0 0.0
    %1284 = vmatpush1.xpose.msra.mxu0 0.0
    %1285 = vmatprep.subr.mxu0 0.0
    %1286 = vmatpush1.xpose.msra.mxu0 0.0
    %1287 = vmatprep.subr.mxu0 0.0
    %1288 = vmatpush1.xpose.msra.mxu0 0.0
    %1289 = vmatprep.subr.mxu0 0.0
    %1290 = vmatpush1.xpose.msra.mxu0 0.0
    %1291 = vmatprep.subr.mxu0 0.0
    %1292 = vmatpush1.xpose.msra.mxu0 0.0
    %1293 = vmatprep.subr.mxu0 0.0
    %1294 = vmatpush1.xpose.msra.mxu0 0.0
    %1295 = vmatprep.subr.mxu0 0.0
    %1296 = vmatpush1.xpose.msra.mxu0 0.0
    %1297 = vmatprep.subr.mxu0 0.0
    %1298 = vmatpush1.xpose.msra.mxu0 0.0
    %1299 = vmatprep.subr.mxu0 0.0
    %1300 = vmatpush1.xpose.msra.mxu0 0.0
    %1301 = vmatprep.subr.mxu0 0.0
    %1302 = vmatpush1.xpose.msra.mxu0 0.0
    %1303 = vmatprep.subr.mxu0 0.0
    %1304 = vmatpush1.xpose.msra.mxu0 0.0
    %1305 = vmatprep.subr.mxu0 0.0
    %1306 = vmatpush1.xpose.msra.mxu0 0.0
    %1307 = vmatprep.subr.mxu0 0.0
    %1308 = vmatpush1.xpose.msra.mxu0 0.0
    %1309 = vmatprep.subr.mxu0 0.0
    %1310 = vmatpush1.xpose.msra.mxu0 0.0
    %1311 = vmatprep.mubr.f32.mxu0 0.0
    %1312 = vmatmul.mubr.f32.gmra.mrb[0].mxu0 %v1242
    %v1313 = vpop.f32.mrb[0].mxu0
    %v1314 = vadd.f32 0.0, %v1313
    %v1315 = vpop.f32.mrb[0].mxu0
    %1316 = vdwg.mxu0
    %v1318 = vsel %vm1164, %v510, 0
    %v1321 = vsel %vm1164, %v802, 0
    %1323 = vmatprep.subr.mxu0 0.0
    %1324 = vmatpush1.xpose.msra.mxu0 %v1321
    %1325 = vmatprep.subr.mxu0 0.0
    %1326 = vmatpush1.xpose.msra.mxu0 0.0
    %1327 = vmatprep.subr.mxu0 0.0
    %1328 = vmatpush1.xpose.msra.mxu0 0.0
    %1329 = vmatprep.subr.mxu0 0.0
    %1330 = vmatpush1.xpose.msra.mxu0 0.0
    %1331 = vmatprep.subr.mxu0 0.0
    %1332 = vmatpush1.xpose.msra.mxu0 0.0
    %1333 = vmatprep.subr.mxu0 0.0
    %1334 = vmatpush1.xpose.msra.mxu0 0.0
    %1335 = vmatprep.subr.mxu0 0.0
    %1336 = vmatpush1.xpose.msra.mxu0 0.0
    %1337 = vmatprep.subr.mxu0 0.0
    %1338 = vmatpush1.xpose.msra.mxu0 0.0
    %1339 = vmatprep.subr.mxu0 0.0
    %1340 = vmatpush1.xpose.msra.mxu0 0.0
    %1341 = vmatprep.subr.mxu0 0.0
    %1342 = vmatpush1.xpose.msra.mxu0 0.0
    %1343 = vmatprep.subr.mxu0 0.0
    %1344 = vmatpush1.xpose.msra.mxu0 0.0
    %1345 = vmatprep.subr.mxu0 0.0
    %1346 = vmatpush1.xpose.msra.mxu0 0.0
    %1347 = vmatprep.subr.mxu0 0.0
    %1348 = vmatpush1.xpose.msra.mxu0 0.0
    %1349 = vmatprep.subr.mxu0 0.0
    %1350 = vmatpush1.xpose.msra.mxu0 0.0
    %1351 = vmatprep.subr.mxu0 0.0
    %1352 = vmatpush1.xpose.msra.mxu0 0.0
    %1353 = vmatprep.subr.mxu0 0.0
    %1354 = vmatpush1.xpose.msra.mxu0 0.0
    %1355 = vmatprep.subr.mxu0 0.0
    %1356 = vmatpush1.xpose.msra.mxu0 0.0
    %1357 = vmatprep.subr.mxu0 0.0
    %1358 = vmatpush1.xpose.msra.mxu0 0.0
    %1359 = vmatprep.subr.mxu0 0.0
    %1360 = vmatpush1.xpose.msra.mxu0 0.0
    %1361 = vmatprep.subr.mxu0 0.0
    %1362 = vmatpush1.xpose.msra.mxu0 0.0
    %1363 = vmatprep.subr.mxu0 0.0
    %1364 = vmatpush1.xpose.msra.mxu0 0.0
    %1365 = vmatprep.subr.mxu0 0.0
    %1366 = vmatpush1.xpose.msra.mxu0 0.0
    %1367 = vmatprep.subr.mxu0 0.0
    %1368 = vmatpush1.xpose.msra.mxu0 0.0
    %1369 = vmatprep.subr.mxu0 0.0
    %1370 = vmatpush1.xpose.msra.mxu0 0.0
    %1371 = vmatprep.subr.mxu0 0.0
    %1372 = vmatpush1.xpose.msra.mxu0 0.0
    %1373 = vmatprep.subr.mxu0 0.0
    %1374 = vmatpush1.xpose.msra.mxu0 0.0
    %1375 = vmatprep.subr.mxu0 0.0
    %1376 = vmatpush1.xpose.msra.mxu0 0.0
    %1377 = vmatprep.subr.mxu0 0.0
    %1378 = vmatpush1.xpose.msra.mxu0 0.0
    %1379 = vmatprep.subr.mxu0 0.0
    %1380 = vmatpush1.xpose.msra.mxu0 0.0
    %1381 = vmatprep.subr.mxu0 0.0
    %1382 = vmatpush1.xpose.msra.mxu0 0.0
    %1383 = vmatprep.subr.mxu0 0.0
    %1384 = vmatpush1.xpose.msra.mxu0 0.0
    %1385 = vmatprep.subr.mxu0 0.0
    %1386 = vmatpush1.xpose.msra.mxu0 0.0
    %1387 = vmatprep.mubr.f32.mxu0 0.0
    %1388 = vmatmul.mubr.f32.gmra.mrb[0].mxu0 %v1318
    %v1389 = vpop.f32.mrb[0].mxu0
    %v1390 = vadd.f32 0.0, %v1389
    %v1391 = vpop.f32.mrb[0].mxu0
    %1392 = vdwg.mxu0
    %v1394 = vsel %vm1164, %v511, 0
    %v1397 = vsel %vm1164, %v803, 0
    %1399 = vmatprep.subr.mxu0 0.0
    %1400 = vmatpush1.xpose.msra.mxu0 %v1397
    %1401 = vmatprep.subr.mxu0 0.0
    %1402 = vmatpush1.xpose.msra.mxu0 0.0
    %1403 = vmatprep.subr.mxu0 0.0
    %1404 = vmatpush1.xpose.msra.mxu0 0.0
    %1405 = vmatprep.subr.mxu0 0.0
    %1406 = vmatpush1.xpose.msra.mxu0 0.0
    %1407 = vmatprep.subr.mxu0 0.0
    %1408 = vmatpush1.xpose.msra.mxu0 0.0
    %1409 = vmatprep.subr.mxu0 0.0
    %1410 = vmatpush1.xpose.msra.mxu0 0.0
    %1411 = vmatprep.subr.mxu0 0.0
    %1412 = vmatpush1.xpose.msra.mxu0 0.0
    %1413 = vmatprep.subr.mxu0 0.0
    %1414 = vmatpush1.xpose.msra.mxu0 0.0
    %1415 = vmatprep.subr.mxu0 0.0
    %1416 = vmatpush1.xpose.msra.mxu0 0.0
    %1417 = vmatprep.subr.mxu0 0.0
    %1418 = vmatpush1.xpose.msra.mxu0 0.0
    %1419 = vmatprep.subr.mxu0 0.0
    %1420 = vmatpush1.xpose.msra.mxu0 0.0
    %1421 = vmatprep.subr.mxu0 0.0
    %1422 = vmatpush1.xpose.msra.mxu0 0.0
    %1423 = vmatprep.subr.mxu0 0.0
    %1424 = vmatpush1.xpose.msra.mxu0 0.0
    %1425 = vmatprep.subr.mxu0 0.0
    %1426 = vmatpush1.xpose.msra.mxu0 0.0
    %1427 = vmatprep.subr.mxu0 0.0
    %1428 = vmatpush1.xpose.msra.mxu0 0.0
    %1429 = vmatprep.subr.mxu0 0.0
    %1430 = vmatpush1.xpose.msra.mxu0 0.0
    %1431 = vmatprep.subr.mxu0 0.0
    %1432 = vmatpush1.xpose.msra.mxu0 0.0
    %1433 = vmatprep.subr.mxu0 0.0
    %1434 = vmatpush1.xpose.msra.mxu0 0.0
    %1435 = vmatprep.subr.mxu0 0.0
    %1436 = vmatpush1.xpose.msra.mxu0 0.0
    %1437 = vmatprep.subr.mxu0 0.0
    %1438 = vmatpush1.xpose.msra.mxu0 0.0
    %1439 = vmatprep.subr.mxu0 0.0
    %1440 = vmatpush1.xpose.msra.mxu0 0.0
    %1441 = vmatprep.subr.mxu0 0.0
    %1442 = vmatpush1.xpose.msra.mxu0 0.0
    %1443 = vmatprep.subr.mxu0 0.0
    %1444 = vmatpush1.xpose.msra.mxu0 0.0
    %1445 = vmatprep.subr.mxu0 0.0
    %1446 = vmatpush1.xpose.msra.mxu0 0.0
    %1447 = vmatprep.subr.mxu0 0.0
    %1448 = vmatpush1.xpose.msra.mxu0 0.0
    %1449 = vmatprep.subr.mxu0 0.0
    %1450 = vmatpush1.xpose.msra.mxu0 0.0
    %1451 = vmatprep.subr.mxu0 0.0
    %1452 = vmatpush1.xpose.msra.mxu0 0.0
    %1453 = vmatprep.subr.mxu0 0.0
    %1454 = vmatpush1.xpose.msra.mxu0 0.0
    %1455 = vmatprep.subr.mxu0 0.0
    %1456 = vmatpush1.xpose.msra.mxu0 0.0
    %1457 = vmatprep.subr.mxu0 0.0
    %1458 = vmatpush1.xpose.msra.mxu0 0.0
    %1459 = vmatprep.subr.mxu0 0.0
    %1460 = vmatpush1.xpose.msra.mxu0 0.0
    %1461 = vmatprep.subr.mxu0 0.0
    %1462 = vmatpush1.xpose.msra.mxu0 0.0
    %1463 = vmatprep.mubr.f32.mxu0 0.0
    %1464 = vmatmul.mubr.f32.gmra.mrb[0].mxu0 %v1394
    %v1465 = vpop.f32.mrb[0].mxu0
    %v1466 = vadd.f32 0.0, %v1465
    %v1467 = vpop.f32.mrb[0].mxu0
    %1468 = vdwg.mxu0
    %v1470 = vsel %vm1164, %v576, 0
    %v1473 = vsel %vm1164, %v868, 0
    %1475 = vmatprep.subr.mxu0 0.0
    %1476 = vmatpush1.xpose.msra.mxu0 %v1473
    %1477 = vmatprep.subr.mxu0 0.0
    %1478 = vmatpush1.xpose.msra.mxu0 0.0
    %1479 = vmatprep.subr.mxu0 0.0
    %1480 = vmatpush1.xpose.msra.mxu0 0.0
    %1481 = vmatprep.subr.mxu0 0.0
    %1482 = vmatpush1.xpose.msra.mxu0 0.0
    %1483 = vmatprep.subr.mxu0 0.0
    %1484 = vmatpush1.xpose.msra.mxu0 0.0
    %1485 = vmatprep.subr.mxu0 0.0
    %1486 = vmatpush1.xpose.msra.mxu0 0.0
    %1487 = vmatprep.subr.mxu0 0.0
    %1488 = vmatpush1.xpose.msra.mxu0 0.0
    %1489 = vmatprep.subr.mxu0 0.0
    %1490 = vmatpush1.xpose.msra.mxu0 0.0
    %1491 = vmatprep.subr.mxu0 0.0
    %1492 = vmatpush1.xpose.msra.mxu0 0.0
    %1493 = vmatprep.subr.mxu0 0.0
    %1494 = vmatpush1.xpose.msra.mxu0 0.0
    %1495 = vmatprep.subr.mxu0 0.0
    %1496 = vmatpush1.xpose.msra.mxu0 0.0
    %1497 = vmatprep.subr.mxu0 0.0
    %1498 = vmatpush1.xpose.msra.mxu0 0.0
    %1499 = vmatprep.subr.mxu0 0.0
    %1500 = vmatpush1.xpose.msra.mxu0 0.0
    %1501 = vmatprep.subr.mxu0 0.0
    %1502 = vmatpush1.xpose.msra.mxu0 0.0
    %1503 = vmatprep.subr.mxu0 0.0
    %1504 = vmatpush1.xpose.msra.mxu0 0.0
    %1505 = vmatprep.subr.mxu0 0.0
    %1506 = vmatpush1.xpose.msra.mxu0 0.0
    %1507 = vmatprep.subr.mxu0 0.0
    %1508 = vmatpush1.xpose.msra.mxu0 0.0
    %1509 = vmatprep.subr.mxu0 0.0
    %1510 = vmatpush1.xpose.msra.mxu0 0.0
    %1511 = vmatprep.subr.mxu0 0.0
    %1512 = vmatpush1.xpose.msra.mxu0 0.0
    %1513 = vmatprep.subr.mxu0 0.0
    %1514 = vmatpush1.xpose.msra.mxu0 0.0
    %1515 = vmatprep.subr.mxu0 0.0
    %1516 = vmatpush1.xpose.msra.mxu0 0.0
    %1517 = vmatprep.subr.mxu0 0.0
    %1518 = vmatpush1.xpose.msra.mxu0 0.0
    %1519 = vmatprep.subr.mxu0 0.0
    %1520 = vmatpush1.xpose.msra.mxu0 0.0
    %1521 = vmatprep.subr.mxu0 0.0
    %1522 = vmatpush1.xpose.msra.mxu0 0.0
    %1523 = vmatprep.subr.mxu0 0.0
    %1524 = vmatpush1.xpose.msra.mxu0 0.0
    %1525 = vmatprep.subr.mxu0 0.0
    %1526 = vmatpush1.xpose.msra.mxu0 0.0
    %1527 = vmatprep.subr.mxu0 0.0
    %1528 = vmatpush1.xpose.msra.mxu0 0.0
    %1529 = vmatprep.subr.mxu0 0.0
    %1530 = vmatpush1.xpose.msra.mxu0 0.0
    %1531 = vmatprep.subr.mxu0 0.0
    %1532 = vmatpush1.xpose.msra.mxu0 0.0
    %1533 = vmatprep.subr.mxu0 0.0
    %1534 = vmatpush1.xpose.msra.mxu0 0.0
    %1535 = vmatprep.subr.mxu0 0.0
    %1536 = vmatpush1.xpose.msra.mxu0 0.0
    %1537 = vmatprep.subr.mxu0 0.0
    %1538 = vmatpush1.xpose.msra.mxu0 0.0
    %1539 = vmatprep.mubr.f32.mxu0 0.0
    %1540 = vmatmul.mubr.f32.gmra.mrb[0].mxu0 %v1470
    %v1541 = vpop.f32.mrb[0].mxu0
    %v1542 = vadd.f32 0.0, %v1541
    %v1543 = vpop.f32.mrb[0].mxu0
    %1544 = vdwg.mxu0
    %v1546 = vsel %vm1164, %v577, 0
    %v1549 = vsel %vm1164, %v869, 0
    %1551 = vmatprep.subr.mxu0 0.0
    %1552 = vmatpush1.xpose.msra.mxu0 %v1549
    %1553 = vmatprep.subr.mxu0 0.0
    %1554 = vmatpush1.xpose.msra.mxu0 0.0
    %1555 = vmatprep.subr.mxu0 0.0
    %1556 = vmatpush1.xpose.msra.mxu0 0.0
    %1557 = vmatprep.subr.mxu0 0.0
    %1558 = vmatpush1.xpose.msra.mxu0 0.0
    %1559 = vmatprep.subr.mxu0 0.0
    %1560 = vmatpush1.xpose.msra.mxu0 0.0
    %1561 = vmatprep.subr.mxu0 0.0
    %1562 = vmatpush1.xpose.msra.mxu0 0.0
    %1563 = vmatprep.subr.mxu0 0.0
    %1564 = vmatpush1.xpose.msra.mxu0 0.0
    %1565 = vmatprep.subr.mxu0 0.0
    %1566 = vmatpush1.xpose.msra.mxu0 0.0
    %1567 = vmatprep.subr.mxu0 0.0
    %1568 = vmatpush1.xpose.msra.mxu0 0.0
    %1569 = vmatprep.subr.mxu0 0.0
    %1570 = vmatpush1.xpose.msra.mxu0 0.0
    %1571 = vmatprep.subr.mxu0 0.0
    %1572 = vmatpush1.xpose.msra.mxu0 0.0
    %1573 = vmatprep.subr.mxu0 0.0
    %1574 = vmatpush1.xpose.msra.mxu0 0.0
    %1575 = vmatprep.subr.mxu0 0.0
    %1576 = vmatpush1.xpose.msra.mxu0 0.0
    %1577 = vmatprep.subr.mxu0 0.0
    %1578 = vmatpush1.xpose.msra.mxu0 0.0
    %1579 = vmatprep.subr.mxu0 0.0
    %1580 = vmatpush1.xpose.msra.mxu0 0.0
    %1581 = vmatprep.subr.mxu0 0.0
    %1582 = vmatpush1.xpose.msra.mxu0 0.0
    %1583 = vmatprep.subr.mxu0 0.0
    %1584 = vmatpush1.xpose.msra.mxu0 0.0
    %1585 = vmatprep.subr.mxu0 0.0
    %1586 = vmatpush1.xpose.msra.mxu0 0.0
    %1587 = vmatprep.subr.mxu0 0.0
    %1588 = vmatpush1.xpose.msra.mxu0 0.0
    %1589 = vmatprep.subr.mxu0 0.0
    %1590 = vmatpush1.xpose.msra.mxu0 0.0
    %1591 = vmatprep.subr.mxu0 0.0
    %1592 = vmatpush1.xpose.msra.mxu0 0.0
    %1593 = vmatprep.subr.mxu0 0.0
    %1594 = vmatpush1.xpose.msra.mxu0 0.0
    %1595 = vmatprep.subr.mxu0 0.0
    %1596 = vmatpush1.xpose.msra.mxu0 0.0
    %1597 = vmatprep.subr.mxu0 0.0
    %1598 = vmatpush1.xpose.msra.mxu0 0.0
    %1599 = vmatprep.subr.mxu0 0.0
    %1600 = vmatpush1.xpose.msra.mxu0 0.0
    %1601 = vmatprep.subr.mxu0 0.0
    %1602 = vmatpush1.xpose.msra.mxu0 0.0
    %1603 = vmatprep.subr.mxu0 0.0
    %1604 = vmatpush1.xpose.msra.mxu0 0.0
    %1605 = vmatprep.subr.mxu0 0.0
    %1606 = vmatpush1.xpose.msra.mxu0 0.0
    %1607 = vmatprep.subr.mxu0 0.0
    %1608 = vmatpush1.xpose.msra.mxu0 0.0
    %1609 = vmatprep.subr.mxu0 0.0
    %1610 = vmatpush1.xpose.msra.mxu0 0.0
    %1611 = vmatprep.subr.mxu0 0.0
    %1612 = vmatpush1.xpose.msra.mxu0 0.0
    %1613 = vmatprep.subr.mxu0 0.0
    %1614 = vmatpush1.xpose.msra.mxu0 0.0
    %1615 = vmatprep.mubr.f32.mxu0 0.0
    %1616 = vmatmul.mubr.f32.gmra.mrb[0].mxu0 %v1546
    %v1617 = vpop.f32.mrb[0].mxu0
    %v1618 = vadd.f32 0.0, %v1617
    %v1619 = vpop.f32.mrb[0].mxu0
    %1620 = vdwg.mxu0
    %v1622 = vsel %vm1164, %v578, 0
    %v1625 = vsel %vm1164, %v870, 0
    %1627 = vmatprep.subr.mxu0 0.0
    %1628 = vmatpush1.xpose.msra.mxu0 %v1625
    %1629 = vmatprep.subr.mxu0 0.0
    %1630 = vmatpush1.xpose.msra.mxu0 0.0
    %1631 = vmatprep.subr.mxu0 0.0
    %1632 = vmatpush1.xpose.msra.mxu0 0.0
    %1633 = vmatprep.subr.mxu0 0.0
    %1634 = vmatpush1.xpose.msra.mxu0 0.0
    %1635 = vmatprep.subr.mxu0 0.0
    %1636 = vmatpush1.xpose.msra.mxu0 0.0
    %1637 = vmatprep.subr.mxu0 0.0
    %1638 = vmatpush1.xpose.msra.mxu0 0.0
    %1639 = vmatprep.subr.mxu0 0.0
    %1640 = vmatpush1.xpose.msra.mxu0 0.0
    %1641 = vmatprep.subr.mxu0 0.0
    %1642 = vmatpush1.xpose.msra.mxu0 0.0
    %1643 = vmatprep.subr.mxu0 0.0
    %1644 = vmatpush1.xpose.msra.mxu0 0.0
    %1645 = vmatprep.subr.mxu0 0.0
    %1646 = vmatpush1.xpose.msra.mxu0 0.0
    %1647 = vmatprep.subr.mxu0 0.0
    %1648 = vmatpush1.xpose.msra.mxu0 0.0
    %1649 = vmatprep.subr.mxu0 0.0
    %1650 = vmatpush1.xpose.msra.mxu0 0.0
    %1651 = vmatprep.subr.mxu0 0.0
    %1652 = vmatpush1.xpose.msra.mxu0 0.0
    %1653 = vmatprep.subr.mxu0 0.0
    %1654 = vmatpush1.xpose.msra.mxu0 0.0
    %1655 = vmatprep.subr.mxu0 0.0
    %1656 = vmatpush1.xpose.msra.mxu0 0.0
    %1657 = vmatprep.subr.mxu0 0.0
    %1658 = vmatpush1.xpose.msra.mxu0 0.0
    %1659 = vmatprep.subr.mxu0 0.0
    %1660 = vmatpush1.xpose.msra.mxu0 0.0
    %1661 = vmatprep.subr.mxu0 0.0
    %1662 = vmatpush1.xpose.msra.mxu0 0.0
    %1663 = vmatprep.subr.mxu0 0.0
    %1664 = vmatpush1.xpose.msra.mxu0 0.0
    %1665 = vmatprep.subr.mxu0 0.0
    %1666 = vmatpush1.xpose.msra.mxu0 0.0
    %1667 = vmatprep.subr.mxu0 0.0
    %1668 = vmatpush1.xpose.msra.mxu0 0.0
    %1669 = vmatprep.subr.mxu0 0.0
    %1670 = vmatpush1.xpose.msra.mxu0 0.0
    %1671 = vmatprep.subr.mxu0 0.0
    %1672 = vmatpush1.xpose.msra.mxu0 0.0
    %1673 = vmatprep.subr.mxu0 0.0
    %1674 = vmatpush1.xpose.msra.mxu0 0.0
    %1675 = vmatprep.subr.mxu0 0.0
    %1676 = vmatpush1.xpose.msra.mxu0 0.0
    %1677 = vmatprep.subr.mxu0 0.0
    %1678 = vmatpush1.xpose.msra.mxu0 0.0
    %1679 = vmatprep.subr.mxu0 0.0
    %1680 = vmatpush1.xpose.msra.mxu0 0.0
    %1681 = vmatprep.subr.mxu0 0.0
    %1682 = vmatpush1.xpose.msra.mxu0 0.0
    %1683 = vmatprep.subr.mxu0 0.0
    %1684 = vmatpush1.xpose.msra.mxu0 0.0
    %1685 = vmatprep.subr.mxu0 0.0
    %1686 = vmatpush1.xpose.msra.mxu0 0.0
    %1687 = vmatprep.subr.mxu0 0.0
    %1688 = vmatpush1.xpose.msra.mxu0 0.0
    %1689 = vmatprep.subr.mxu0 0.0
    %1690 = vmatpush1.xpose.msra.mxu0 0.0
    %1691 = vmatprep.mubr.f32.mxu0 0.0
    %1692 = vmatmul.mubr.f32.gmra.mrb[0].mxu0 %v1622
    %v1693 = vpop.f32.mrb[0].mxu0
    %v1694 = vadd.f32 0.0, %v1693
    %v1695 = vpop.f32.mrb[0].mxu0
    %1696 = vdwg.mxu0
    %v1698 = vsel %vm1164, %v579, 0
    %v1701 = vsel %vm1164, %v871, 0
    %1703 = vmatprep.subr.mxu0 0.0
    %1704 = vmatpush1.xpose.msra.mxu0 %v1701
    %1705 = vmatprep.subr.mxu0 0.0
    %1706 = vmatpush1.xpose.msra.mxu0 0.0
    %1707 = vmatprep.subr.mxu0 0.0
    %1708 = vmatpush1.xpose.msra.mxu0 0.0
    %1709 = vmatprep.subr.mxu0 0.0
    %1710 = vmatpush1.xpose.msra.mxu0 0.0
    %1711 = vmatprep.subr.mxu0 0.0
    %1712 = vmatpush1.xpose.msra.mxu0 0.0
    %1713 = vmatprep.subr.mxu0 0.0
    %1714 = vmatpush1.xpose.msra.mxu0 0.0
    %1715 = vmatprep.subr.mxu0 0.0
    %1716 = vmatpush1.xpose.msra.mxu0 0.0
    %1717 = vmatprep.subr.mxu0 0.0
    %1718 = vmatpush1.xpose.msra.mxu0 0.0
    %1719 = vmatprep.subr.mxu0 0.0
    %1720 = vmatpush1.xpose.msra.mxu0 0.0
    %1721 = vmatprep.subr.mxu0 0.0
    %1722 = vmatpush1.xpose.msra.mxu0 0.0
    %1723 = vmatprep.subr.mxu0 0.0
    %1724 = vmatpush1.xpose.msra.mxu0 0.0
    %1725 = vmatprep.subr.mxu0 0.0
    %1726 = vmatpush1.xpose.msra.mxu0 0.0
    %1727 = vmatprep.subr.mxu0 0.0
    %1728 = vmatpush1.xpose.msra.mxu0 0.0
    %1729 = vmatprep.subr.mxu0 0.0
    %1730 = vmatpush1.xpose.msra.mxu0 0.0
    %1731 = vmatprep.subr.mxu0 0.0
    %1732 = vmatpush1.xpose.msra.mxu0 0.0
    %1733 = vmatprep.subr.mxu0 0.0
    %1734 = vmatpush1.xpose.msra.mxu0 0.0
    %1735 = vmatprep.subr.mxu0 0.0
    %1736 = vmatpush1.xpose.msra.mxu0 0.0
    %1737 = vmatprep.subr.mxu0 0.0
    %1738 = vmatpush1.xpose.msra.mxu0 0.0
    %1739 = vmatprep.subr.mxu0 0.0
    %1740 = vmatpush1.xpose.msra.mxu0 0.0
    %1741 = vmatprep.subr.mxu0 0.0
    %1742 = vmatpush1.xpose.msra.mxu0 0.0
    %1743 = vmatprep.subr.mxu0 0.0
    %1744 = vmatpush1.xpose.msra.mxu0 0.0
    %1745 = vmatprep.subr.mxu0 0.0
    %1746 = vmatpush1.xpose.msra.mxu0 0.0
    %1747 = vmatprep.subr.mxu0 0.0
    %1748 = vmatpush1.xpose.msra.mxu0 0.0
    %1749 = vmatprep.subr.mxu0 0.0
    %1750 = vmatpush1.xpose.msra.mxu0 0.0
    %1751 = vmatprep.subr.mxu0 0.0
    %1752 = vmatpush1.xpose.msra.mxu0 0.0
    %1753 = vmatprep.subr.mxu0 0.0
    %1754 = vmatpush1.xpose.msra.mxu0 0.0
    %1755 = vmatprep.subr.mxu0 0.0
    %1756 = vmatpush1.xpose.msra.mxu0 0.0
    %1757 = vmatprep.subr.mxu0 0.0
    %1758 = vmatpush1.xpose.msra.mxu0 0.0
    %1759 = vmatprep.subr.mxu0 0.0
    %1760 = vmatpush1.xpose.msra.mxu0 0.0
    %1761 = vmatprep.subr.mxu0 0.0
    %1762 = vmatpush1.xpose.msra.mxu0 0.0
    %1763 = vmatprep.subr.mxu0 0.0
    %1764 = vmatpush1.xpose.msra.mxu0 0.0
    %1765 = vmatprep.subr.mxu0 0.0
    %1766 = vmatpush1.xpose.msra.mxu0 0.0
    %1767 = vmatprep.mubr.f32.mxu0 0.0
    %1768 = vmatmul.mubr.f32.gmra.mrb[0].mxu0 %v1698
    %v1769 = vpop.f32.mrb[0].mxu0
    %v1770 = vadd.f32 0.0, %v1769
    %v1771 = vpop.f32.mrb[0].mxu0
    %1772 = vdwg.mxu0
    %v1773 = vmul.f32 %v1238, 0.35355338
    %v1774 = vmul.f32 %v1314, 0.35355338
    %v1775 = vmul.f32 %v1390, 0.35355338
    %v1776 = vmul.f32 %v1466, 0.35355338
    %v1777 = vmul.f32 %v1542, 0.35355338
    %v1778 = vmul.f32 %v1618, 0.35355338
    %v1779 = vmul.f32 %v1694, 0.35355338
    %v1780 = vmul.f32 %v1770, 0.35355338
    %vm1781 = vcmp.eq.f32.partialorder %v87, 0.0
    %vm1782 = vcmp.eq.f32.partialorder %v88, 0.0
    %v1783 = vsel %vm1781, -1e+09, %v1773
    %v1784 = vsel %vm1781, -1e+09, %v1774
    %v1785 = vsel %vm1781, -1e+09, %v1775
    %v1786 = vsel %vm1781, -1e+09, %v1776
    %v1787 = vsel %vm1782, -1e+09, %v1777
    %v1788 = vsel %vm1782, -1e+09, %v1778
    %v1789 = vsel %vm1782, -1e+09, %v1779
    %v1790 = vsel %vm1782, -1e+09, %v1780
    %v1791 = vsel %vm1164, %v1783, -inf
    %1792 = vmax.xlane.f32.xlu0 %v1791
    %v1793 = vpop.xlane.xlu0 %1792
    %v1794 = vsel %vm1164, %v1784, -inf
    %1795 = vmax.xlane.f32.xlu0 %v1794
    %v1796 = vpop.xlane.xlu0 %1795
    %v1797 = vsel %vm1164, %v1785, -inf
    %1798 = vmax.xlane.f32.xlu0 %v1797
    %v1799 = vpop.xlane.xlu0 %1798
    %v1800 = vsel %vm1164, %v1786, -inf
    %1801 = vmax.xlane.f32.xlu0 %v1800
    %v1802 = vpop.xlane.xlu0 %1801
    %v1803 = vsel %vm1164, %v1787, -inf
    %1804 = vmax.xlane.f32.xlu0 %v1803
    %v1805 = vpop.xlane.xlu0 %1804
    %v1806 = vsel %vm1164, %v1788, -inf
    %1807 = vmax.xlane.f32.xlu0 %v1806
    %v1808 = vpop.xlane.xlu0 %1807
    %v1809 = vsel %vm1164, %v1789, -inf
    %1810 = vmax.xlane.f32.xlu0 %v1809
    %v1811 = vpop.xlane.xlu0 %1810
    %v1812 = vsel %vm1164, %v1790, -inf
    %1813 = vmax.xlane.f32.xlu0 %v1812
    %v1814 = vpop.xlane.xlu0 %1813
    %v1815 = vsub.f32 %v1783, %v1793
    %v1816 = vsub.f32 %v1784, %v1796
    %v1817 = vsub.f32 %v1785, %v1799
    %v1818 = vsub.f32 %v1786, %v1802
    %v1819 = vsub.f32 %v1787, %v1805
    %v1820 = vsub.f32 %v1788, %v1808
    %v1821 = vsub.f32 %v1789, %v1811
    %v1822 = vsub.f32 %v1790, %v1814
    %v1823 = vmul.f32 %v1815, 1.442695
    %v1824 = vpow.pop %v1823
    %v1825 = vmul.f32 %v1816, 1.442695
    %v1826 = vpow.pop %v1825
    %v1827 = vmul.f32 %v1817, 1.442695
    %v1828 = vpow.pop %v1827
    %v1829 = vmul.f32 %v1818, 1.442695
    %v1830 = vpow.pop %v1829
    %v1831 = vmul.f32 %v1819, 1.442695
    %v1832 = vpow.pop %v1831
    %v1833 = vmul.f32 %v1820, 1.442695
    %v1834 = vpow.pop %v1833
    %v1835 = vmul.f32 %v1821, 1.442695
    %v1836 = vpow.pop %v1835
    %v1837 = vmul.f32 %v1822, 1.442695
    %v1838 = vpow.pop %v1837
    %v1839 = vsel %vm1164, %v1824, 0.0
    %1840 = vadd.xlane.f32.xlu0 %v1839
    %v1841 = vpop.xlane.xlu0 %1840
    %v1842 = vsel %vm1164, %v1826, 0.0
    %1843 = vadd.xlane.f32.xlu0 %v1842
    %v1844 = vpop.xlane.xlu0 %1843
    %v1845 = vsel %vm1164, %v1828, 0.0
    %1846 = vadd.xlane.f32.xlu0 %v1845
    %v1847 = vpop.xlane.xlu0 %1846
    %v1848 = vsel %vm1164, %v1830, 0.0
    %1849 = vadd.xlane.f32.xlu0 %v1848
    %v1850 = vpop.xlane.xlu0 %1849
    %v1851 = vsel %vm1164, %v1832, 0.0
    %1852 = vadd.xlane.f32.xlu0 %v1851
    %v1853 = vpop.xlane.xlu0 %1852
    %v1854 = vsel %vm1164, %v1834, 0.0
    %1855 = vadd.xlane.f32.xlu0 %v1854
    %v1856 = vpop.xlane.xlu0 %1855
    %v1857 = vsel %vm1164, %v1836, 0.0
    %1858 = vadd.xlane.f32.xlu0 %v1857
    %v1859 = vpop.xlane.xlu0 %1858
    %v1860 = vsel %vm1164, %v1838, 0.0
    %1861 = vadd.xlane.f32.xlu0 %v1860
    %v1862 = vpop.xlane.xlu0 %1861
    %v1863 = vrcp.pop %v1841
    %v1864 = vmul.f32 %v1824, %v1863
    %v1865 = vrcp.pop %v1844
    %v1866 = vmul.f32 %v1826, %v1865
    %v1867 = vrcp.pop %v1847
    %v1868 = vmul.f32 %v1828, %v1867
    %v1869 = vrcp.pop %v1850
    %v1870 = vmul.f32 %v1830, %v1869
    %v1871 = vrcp.pop %v1853
    %v1872 = vmul.f32 %v1832, %v1871
    %v1873 = vrcp.pop %v1856
    %v1874 = vmul.f32 %v1834, %v1873
    %v1875 = vrcp.pop %v1859
    %v1876 = vmul.f32 %v1836, %v1875
    %v1877 = vrcp.pop %v1862
    %v1878 = vmul.f32 %v1838, %v1877
    %v1880 = vsel %vm1164, %v1864, 0
    %1882 = vmatprep.subr.mxu0 0.0
    %1883 = vmatpush1.msra.mxu0 %v1092
    %1884 = vmatprep.subr.mxu0 0.0
    %1885 = vmatpush1.msra.mxu0 0.0
    %1886 = vmatprep.subr.mxu0 0.0
    %1887 = vmatpush1.msra.mxu0 0.0
    %1888 = vmatprep.subr.mxu0 0.0
    %1889 = vmatpush1.msra.mxu0 0.0
    %1890 = vmatprep.subr.mxu0 0.0
    %1891 = vmatpush1.msra.mxu0 0.0
    %1892 = vmatprep.subr.mxu0 0.0
    %1893 = vmatpush1.msra.mxu0 0.0
    %1894 = vmatprep.subr.mxu0 0.0
    %1895 = vmatpush1.msra.mxu0 0.0
    %1896 = vmatprep.subr.mxu0 0.0
    %1897 = vmatpush1.msra.mxu0 0.0
    %1898 = vmatprep.subr.mxu0 0.0
    %1899 = vmatpush1.msra.mxu0 0.0
    %1900 = vmatprep.subr.mxu0 0.0
    %1901 = vmatpush1.msra.mxu0 0.0
    %1902 = vmatprep.subr.mxu0 0.0
    %1903 = vmatpush1.msra.mxu0 0.0
    %1904 = vmatprep.subr.mxu0 0.0
    %1905 = vmatpush1.msra.mxu0 0.0
    %1906 = vmatprep.subr.mxu0 0.0
    %1907 = vmatpush1.msra.mxu0 0.0
    %1908 = vmatprep.subr.mxu0 0.0
    %1909 = vmatpush1.msra.mxu0 0.0
    %1910 = vmatprep.subr.mxu0 0.0
    %1911 = vmatpush1.msra.mxu0 0.0
    %1912 = vmatprep.subr.mxu0 0.0
    %1913 = vmatpush1.msra.mxu0 0.0
    %1914 = vmatprep.subr.mxu0 0.0
    %1915 = vmatpush1.msra.mxu0 0.0
    %1916 = vmatprep.subr.mxu0 0.0
    %1917 = vmatpush1.msra.mxu0 0.0
    %1918 = vmatprep.subr.mxu0 0.0
    %1919 = vmatpush1.msra.mxu0 0.0
    %1920 = vmatprep.subr.mxu0 0.0
    %1921 = vmatpush1.msra.mxu0 0.0
    %1922 = vmatprep.subr.mxu0 0.0
    %1923 = vmatpush1.msra.mxu0 0.0
    %1924 = vmatprep.subr.mxu0 0.0
    %1925 = vmatpush1.msra.mxu0 0.0
    %1926 = vmatprep.subr.mxu0 0.0
    %1927 = vmatpush1.msra.mxu0 0.0
    %1928 = vmatprep.subr.mxu0 0.0
    %1929 = vmatpush1.msra.mxu0 0.0
    %1930 = vmatprep.subr.mxu0 0.0
    %1931 = vmatpush1.msra.mxu0 0.0
    %1932 = vmatprep.subr.mxu0 0.0
    %1933 = vmatpush1.msra.mxu0 0.0
    %1934 = vmatprep.subr.mxu0 0.0
    %1935 = vmatpush1.msra.mxu0 0.0
    %1936 = vmatprep.subr.mxu0 0.0
    %1937 = vmatpush1.msra.mxu0 0.0
    %1938 = vmatprep.subr.mxu0 0.0
    %1939 = vmatpush1.msra.mxu0 0.0
    %1940 = vmatprep.subr.mxu0 0.0
    %1941 = vmatpush1.msra.mxu0 0.0
    %1942 = vmatprep.subr.mxu0 0.0
    %1943 = vmatpush1.msra.mxu0 0.0
    %1944 = vmatprep.subr.mxu0 0.0
    %1945 = vmatpush1.msra.mxu0 0.0
    %1946 = vmatprep.mubr.f32.mxu0 0.0
    %1947 = vmatmul.mubr.f32.gmra.mrb[0].mxu0 %v1880
    %v1948 = vpop.f32.mrb[0].mxu0
    %v1949 = vadd.f32 0.0, %v1948
    %v1950 = vpop.f32.mrb[0].mxu0
    %1951 = vdwg.mxu0
    %v1953 = vsel %vm1164, %v1866, 0
    %1955 = vmatprep.subr.mxu0 0.0
    %1956 = vmatpush1.msra.mxu0 %v1093
    %1957 = vmatprep.subr.mxu0 0.0
    %1958 = vmatpush1.msra.mxu0 0.0
    %1959 = vmatprep.subr.mxu0 0.0
    %1960 = vmatpush1.msra.mxu0 0.0
    %1961 = vmatprep.subr.mxu0 0.0
    %1962 = vmatpush1.msra.mxu0 0.0
    %1963 = vmatprep.subr.mxu0 0.0
    %1964 = vmatpush1.msra.mxu0 0.0
    %1965 = vmatprep.subr.mxu0 0.0
    %1966 = vmatpush1.msra.mxu0 0.0
    %1967 = vmatprep.subr.mxu0 0.0
    %1968 = vmatpush1.msra.mxu0 0.0
    %1969 = vmatprep.subr.mxu0 0.0
    %1970 = vmatpush1.msra.mxu0 0.0
    %1971 = vmatprep.subr.mxu0 0.0
    %1972 = vmatpush1.msra.mxu0 0.0
    %1973 = vmatprep.subr.mxu0 0.0
    %1974 = vmatpush1.msra.mxu0 0.0
    %1975 = vmatprep.subr.mxu0 0.0
    %1976 = vmatpush1.msra.mxu0 0.0
    %1977 = vmatprep.subr.mxu0 0.0
    %1978 = vmatpush1.msra.mxu0 0.0
    %1979 = vmatprep.subr.mxu0 0.0
    %1980 = vmatpush1.msra.mxu0 0.0
    %1981 = vmatprep.subr.mxu0 0.0
    %1982 = vmatpush1.msra.mxu0 0.0
    %1983 = vmatprep.subr.mxu0 0.0
    %1984 = vmatpush1.msra.mxu0 0.0
    %1985 = vmatprep.subr.mxu0 0.0
    %1986 = vmatpush1.msra.mxu0 0.0
    %1987 = vmatprep.subr.mxu0 0.0
    %1988 = vmatpush1.msra.mxu0 0.0
    %1989 = vmatprep.subr.mxu0 0.0
    %1990 = vmatpush1.msra.mxu0 0.0
    %1991 = vmatprep.subr.mxu0 0.0
    %1992 = vmatpush1.msra.mxu0 0.0
    %1993 = vmatprep.subr.mxu0 0.0
    %1994 = vmatpush1.msra.mxu0 0.0
    %1995 = vmatprep.subr.mxu0 0.0
    %1996 = vmatpush1.msra.mxu0 0.0
    %1997 = vmatprep.subr.mxu0 0.0
    %1998 = vmatpush1.msra.mxu0 0.0
    %1999 = vmatprep.subr.mxu0 0.0
    %2000 = vmatpush1.msra.mxu0 0.0
    %2001 = vmatprep.subr.mxu0 0.0
    %2002 = vmatpush1.msra.mxu0 0.0
    %2003 = vmatprep.subr.mxu0 0.0
    %2004 = vmatpush1.msra.mxu0 0.0
    %2005 = vmatprep.subr.mxu0 0.0
    %2006 = vmatpush1.msra.mxu0 0.0
    %2007 = vmatprep.subr.mxu0 0.0
    %2008 = vmatpush1.msra.mxu0 0.0
    %2009 = vmatprep.subr.mxu0 0.0
    %2010 = vmatpush1.msra.mxu0 0.0
    %2011 = vmatprep.subr.mxu0 0.0
    %2012 = vmatpush1.msra.mxu0 0.0
    %2013 = vmatprep.subr.mxu0 0.0
    %2014 = vmatpush1.msra.mxu0 0.0
    %2015 = vmatprep.subr.mxu0 0.0
    %2016 = vmatpush1.msra.mxu0 0.0
    %2017 = vmatprep.subr.mxu0 0.0
    %2018 = vmatpush1.msra.mxu0 0.0
    %2019 = vmatprep.mubr.f32.mxu0 0.0
    %2020 = vmatmul.mubr.f32.gmra.mrb[0].mxu0 %v1953
    %v2021 = vpop.f32.mrb[0].mxu0
    %v2022 = vadd.f32 0.0, %v2021
    %v2023 = vpop.f32.mrb[0].mxu0
    %2024 = vdwg.mxu0
    %v2026 = vsel %vm1164, %v1868, 0
    %2028 = vmatprep.subr.mxu0 0.0
    %2029 = vmatpush1.msra.mxu0 %v1094
    %2030 = vmatprep.subr.mxu0 0.0
    %2031 = vmatpush1.msra.mxu0 0.0
    %2032 = vmatprep.subr.mxu0 0.0
    %2033 = vmatpush1.msra.mxu0 0.0
    %2034 = vmatprep.subr.mxu0 0.0
    %2035 = vmatpush1.msra.mxu0 0.0
    %2036 = vmatprep.subr.mxu0 0.0
    %2037 = vmatpush1.msra.mxu0 0.0
    %2038 = vmatprep.subr.mxu0 0.0
    %2039 = vmatpush1.msra.mxu0 0.0
    %2040 = vmatprep.subr.mxu0 0.0
    %2041 = vmatpush1.msra.mxu0 0.0
    %2042 = vmatprep.subr.mxu0 0.0
    %2043 = vmatpush1.msra.mxu0 0.0
    %2044 = vmatprep.subr.mxu0 0.0
    %2045 = vmatpush1.msra.mxu0 0.0
    %2046 = vmatprep.subr.mxu0 0.0
    %2047 = vmatpush1.msra.mxu0 0.0
    %2048 = vmatprep.subr.mxu0 0.0
    %2049 = vmatpush1.msra.mxu0 0.0
    %2050 = vmatprep.subr.mxu0 0.0
    %2051 = vmatpush1.msra.mxu0 0.0
    %2052 = vmatprep.subr.mxu0 0.0
    %2053 = vmatpush1.msra.mxu0 0.0
    %2054 = vmatprep.subr.mxu0 0.0
    %2055 = vmatpush1.msra.mxu0 0.0
    %2056 = vmatprep.subr.mxu0 0.0
    %2057 = vmatpush1.msra.mxu0 0.0
    %2058 = vmatprep.subr.mxu0 0.0
    %2059 = vmatpush1.msra.mxu0 0.0
    %2060 = vmatprep.subr.mxu0 0.0
    %2061 = vmatpush1.msra.mxu0 0.0
    %2062 = vmatprep.subr.mxu0 0.0
    %2063 = vmatpush1.msra.mxu0 0.0
    %2064 = vmatprep.subr.mxu0 0.0
    %2065 = vmatpush1.msra.mxu0 0.0
    %2066 = vmatprep.subr.mxu0 0.0
    %2067 = vmatpush1.msra.mxu0 0.0
    %2068 = vmatprep.subr.mxu0 0.0
    %2069 = vmatpush1.msra.mxu0 0.0
    %2070 = vmatprep.subr.mxu0 0.0
    %2071 = vmatpush1.msra.mxu0 0.0
    %2072 = vmatprep.subr.mxu0 0.0
    %2073 = vmatpush1.msra.mxu0 0.0
    %2074 = vmatprep.subr.mxu0 0.0
    %2075 = vmatpush1.msra.mxu0 0.0
    %2076 = vmatprep.subr.mxu0 0.0
    %2077 = vmatpush1.msra.mxu0 0.0
    %2078 = vmatprep.subr.mxu0 0.0
    %2079 = vmatpush1.msra.mxu0 0.0
    %2080 = vmatprep.subr.mxu0 0.0
    %2081 = vmatpush1.msra.mxu0 0.0
    %2082 = vmatprep.subr.mxu0 0.0
    %2083 = vmatpush1.msra.mxu0 0.0
    %2084 = vmatprep.subr.mxu0 0.0
    %2085 = vmatpush1.msra.mxu0 0.0
    %2086 = vmatprep.subr.mxu0 0.0
    %2087 = vmatpush1.msra.mxu0 0.0
    %2088 = vmatprep.subr.mxu0 0.0
    %2089 = vmatpush1.msra.mxu0 0.0
    %2090 = vmatprep.subr.mxu0 0.0
    %2091 = vmatpush1.msra.mxu0 0.0
    %2092 = vmatprep.mubr.f32.mxu0 0.0
    %2093 = vmatmul.mubr.f32.gmra.mrb[0].mxu0 %v2026
    %v2094 = vpop.f32.mrb[0].mxu0
    %v2095 = vadd.f32 0.0, %v2094
    %v2096 = vpop.f32.mrb[0].mxu0
    %2097 = vdwg.mxu0
    %v2099 = vsel %vm1164, %v1870, 0
    %2101 = vmatprep.subr.mxu0 0.0
    %2102 = vmatpush1.msra.mxu0 %v1095
    %2103 = vmatprep.subr.mxu0 0.0
    %2104 = vmatpush1.msra.mxu0 0.0
    %2105 = vmatprep.subr.mxu0 0.0
    %2106 = vmatpush1.msra.mxu0 0.0
    %2107 = vmatprep.subr.mxu0 0.0
    %2108 = vmatpush1.msra.mxu0 0.0
    %2109 = vmatprep.subr.mxu0 0.0
    %2110 = vmatpush1.msra.mxu0 0.0
    %2111 = vmatprep.subr.mxu0 0.0
    %2112 = vmatpush1.msra.mxu0 0.0
    %2113 = vmatprep.subr.mxu0 0.0
    %2114 = vmatpush1.msra.mxu0 0.0
    %2115 = vmatprep.subr.mxu0 0.0
    %2116 = vmatpush1.msra.mxu0 0.0
    %2117 = vmatprep.subr.mxu0 0.0
    %2118 = vmatpush1.msra.mxu0 0.0
    %2119 = vmatprep.subr.mxu0 0.0
    %2120 = vmatpush1.msra.mxu0 0.0
    %2121 = vmatprep.subr.mxu0 0.0
    %2122 = vmatpush1.msra.mxu0 0.0
    %2123 = vmatprep.subr.mxu0 0.0
    %2124 = vmatpush1.msra.mxu0 0.0
    %2125 = vmatprep.subr.mxu0 0.0
    %2126 = vmatpush1.msra.mxu0 0.0
    %2127 = vmatprep.subr.mxu0 0.0
    %2128 = vmatpush1.msra.mxu0 0.0
    %2129 = vmatprep.subr.mxu0 0.0
    %2130 = vmatpush1.msra.mxu0 0.0
    %2131 = vmatprep.subr.mxu0 0.0
    %2132 = vmatpush1.msra.mxu0 0.0
    %2133 = vmatprep.subr.mxu0 0.0
    %2134 = vmatpush1.msra.mxu0 0.0
    %2135 = vmatprep.subr.mxu0 0.0
    %2136 = vmatpush1.msra.mxu0 0.0
    %2137 = vmatprep.subr.mxu0 0.0
    %2138 = vmatpush1.msra.mxu0 0.0
    %2139 = vmatprep.subr.mxu0 0.0
    %2140 = vmatpush1.msra.mxu0 0.0
    %2141 = vmatprep.subr.mxu0 0.0
    %2142 = vmatpush1.msra.mxu0 0.0
    %2143 = vmatprep.subr.mxu0 0.0
    %2144 = vmatpush1.msra.mxu0 0.0
    %2145 = vmatprep.subr.mxu0 0.0
    %2146 = vmatpush1.msra.mxu0 0.0
    %2147 = vmatprep.subr.mxu0 0.0
    %2148 = vmatpush1.msra.mxu0 0.0
    %2149 = vmatprep.subr.mxu0 0.0
    %2150 = vmatpush1.msra.mxu0 0.0
    %2151 = vmatprep.subr.mxu0 0.0
    %2152 = vmatpush1.msra.mxu0 0.0
    %2153 = vmatprep.subr.mxu0 0.0
    %2154 = vmatpush1.msra.mxu0 0.0
    %2155 = vmatprep.subr.mxu0 0.0
    %2156 = vmatpush1.msra.mxu0 0.0
    %2157 = vmatprep.subr.mxu0 0.0
    %2158 = vmatpush1.msra.mxu0 0.0
    %2159 = vmatprep.subr.mxu0 0.0
    %2160 = vmatpush1.msra.mxu0 0.0
    %2161 = vmatprep.subr.mxu0 0.0
    %2162 = vmatpush1.msra.mxu0 0.0
    %2163 = vmatprep.subr.mxu0 0.0
    %2164 = vmatpush1.msra.mxu0 0.0
    %2165 = vmatprep.mubr.f32.mxu0 0.0
    %2166 = vmatmul.mubr.f32.gmra.mrb[0].mxu0 %v2099
    %v2167 = vpop.f32.mrb[0].mxu0
    %v2168 = vadd.f32 0.0, %v2167
    %v2169 = vpop.f32.mrb[0].mxu0
    %2170 = vdwg.mxu0
    %v2172 = vsel %vm1164, %v1872, 0
    %2174 = vmatprep.subr.mxu0 0.0
    %2175 = vmatpush1.msra.mxu0 %v1160
    %2176 = vmatprep.subr.mxu0 0.0
    %2177 = vmatpush1.msra.mxu0 0.0
    %2178 = vmatprep.subr.mxu0 0.0
    %2179 = vmatpush1.msra.mxu0 0.0
    %2180 = vmatprep.subr.mxu0 0.0
    %2181 = vmatpush1.msra.mxu0 0.0
    %2182 = vmatprep.subr.mxu0 0.0
    %2183 = vmatpush1.msra.mxu0 0.0
    %2184 = vmatprep.subr.mxu0 0.0
    %2185 = vmatpush1.msra.mxu0 0.0
    %2186 = vmatprep.subr.mxu0 0.0
    %2187 = vmatpush1.msra.mxu0 0.0
    %2188 = vmatprep.subr.mxu0 0.0
    %2189 = vmatpush1.msra.mxu0 0.0
    %2190 = vmatprep.subr.mxu0 0.0
    %2191 = vmatpush1.msra.mxu0 0.0
    %2192 = vmatprep.subr.mxu0 0.0
    %2193 = vmatpush1.msra.mxu0 0.0
    %2194 = vmatprep.subr.mxu0 0.0
    %2195 = vmatpush1.msra.mxu0 0.0
    %2196 = vmatprep.subr.mxu0 0.0
    %2197 = vmatpush1.msra.mxu0 0.0
    %2198 = vmatprep.subr.mxu0 0.0
    %2199 = vmatpush1.msra.mxu0 0.0
    %2200 = vmatprep.subr.mxu0 0.0
    %2201 = vmatpush1.msra.mxu0 0.0
    %2202 = vmatprep.subr.mxu0 0.0
    %2203 = vmatpush1.msra.mxu0 0.0
    %2204 = vmatprep.subr.mxu0 0.0
    %2205 = vmatpush1.msra.mxu0 0.0
    %2206 = vmatprep.subr.mxu0 0.0
    %2207 = vmatpush1.msra.mxu0 0.0
    %2208 = vmatprep.subr.mxu0 0.0
    %2209 = vmatpush1.msra.mxu0 0.0
    %2210 = vmatprep.subr.mxu0 0.0
    %2211 = vmatpush1.msra.mxu0 0.0
    %2212 = vmatprep.subr.mxu0 0.0
    %2213 = vmatpush1.msra.mxu0 0.0
    %2214 = vmatprep.subr.mxu0 0.0
    %2215 = vmatpush1.msra.mxu0 0.0
    %2216 = vmatprep.subr.mxu0 0.0
    %2217 = vmatpush1.msra.mxu0 0.0
    %2218 = vmatprep.subr.mxu0 0.0
    %2219 = vmatpush1.msra.mxu0 0.0
    %2220 = vmatprep.subr.mxu0 0.0
    %2221 = vmatpush1.msra.mxu0 0.0
    %2222 = vmatprep.subr.mxu0 0.0
    %2223 = vmatpush1.msra.mxu0 0.0
    %2224 = vmatprep.subr.mxu0 0.0
    %2225 = vmatpush1.msra.mxu0 0.0
    %2226 = vmatprep.subr.mxu0 0.0
    %2227 = vmatpush1.msra.mxu0 0.0
    %2228 = vmatprep.subr.mxu0 0.0
    %2229 = vmatpush1.msra.mxu0 0.0
    %2230 = vmatprep.subr.mxu0 0.0
    %2231 = vmatpush1.msra.mxu0 0.0
    %2232 = vmatprep.subr.mxu0 0.0
    %2233 = vmatpush1.msra.mxu0 0.0
    %2234 = vmatprep.subr.mxu0 0.0
    %2235 = vmatpush1.msra.mxu0 0.0
    %2236 = vmatprep.subr.mxu0 0.0
    %2237 = vmatpush1.msra.mxu0 0.0
    %2238 = vmatprep.mubr.f32.mxu0 0.0
    %2239 = vmatmul.mubr.f32.gmra.mrb[0].mxu0 %v2172
    %v2240 = vpop.f32.mrb[0].mxu0
    %v2241 = vadd.f32 0.0, %v2240
    %v2242 = vpop.f32.mrb[0].mxu0
    %2243 = vdwg.mxu0
    %v2245 = vsel %vm1164, %v1874, 0
    %2247 = vmatprep.subr.mxu0 0.0
    %2248 = vmatpush1.msra.mxu0 %v1161
    %2249 = vmatprep.subr.mxu0 0.0
    %2250 = vmatpush1.msra.mxu0 0.0
    %2251 = vmatprep.subr.mxu0 0.0
    %2252 = vmatpush1.msra.mxu0 0.0
    %2253 = vmatprep.subr.mxu0 0.0
    %2254 = vmatpush1.msra.mxu0 0.0
    %2255 = vmatprep.subr.mxu0 0.0
    %2256 = vmatpush1.msra.mxu0 0.0
    %2257 = vmatprep.subr.mxu0 0.0
    %2258 = vmatpush1.msra.mxu0 0.0
    %2259 = vmatprep.subr.mxu0 0.0
    %2260 = vmatpush1.msra.mxu0 0.0
    %2261 = vmatprep.subr.mxu0 0.0
    %2262 = vmatpush1.msra.mxu0 0.0
    %2263 = vmatprep.subr.mxu0 0.0
    %2264 = vmatpush1.msra.mxu0 0.0
    %2265 = vmatprep.subr.mxu0 0.0
    %2266 = vmatpush1.msra.mxu0 0.0
    %2267 = vmatprep.subr.mxu0 0.0
    %2268 = vmatpush1.msra.mxu0 0.0
    %2269 = vmatprep.subr.mxu0 0.0
    %2270 = vmatpush1.msra.mxu0 0.0
    %2271 = vmatprep.subr.mxu0 0.0
    %2272 = vmatpush1.msra.mxu0 0.0
    %2273 = vmatprep.subr.mxu0 0.0
    %2274 = vmatpush1.msra.mxu0 0.0
    %2275 = vmatprep.subr.mxu0 0.0
    %2276 = vmatpush1.msra.mxu0 0.0
    %2277 = vmatprep.subr.mxu0 0.0
    %2278 = vmatpush1.msra.mxu0 0.0
    %2279 = vmatprep.subr.mxu0 0.0
    %2280 = vmatpush1.msra.mxu0 0.0
    %2281 = vmatprep.subr.mxu0 0.0
    %2282 = vmatpush1.msra.mxu0 0.0
    %2283 = vmatprep.subr.mxu0 0.0
    %2284 = vmatpush1.msra.mxu0 0.0
    %2285 = vmatprep.subr.mxu0 0.0
    %2286 = vmatpush1.msra.mxu0 0.0
    %2287 = vmatprep.subr.mxu0 0.0
    %2288 = vmatpush1.msra.mxu0 0.0
    %2289 = vmatprep.subr.mxu0 0.0
    %2290 = vmatpush1.msra.mxu0 0.0
    %2291 = vmatprep.subr.mxu0 0.0
    %2292 = vmatpush1.msra.mxu0 0.0
    %2293 = vmatprep.subr.mxu0 0.0
    %2294 = vmatpush1.msra.mxu0 0.0
    %2295 = vmatprep.subr.mxu0 0.0
    %2296 = vmatpush1.msra.mxu0 0.0
    %2297 = vmatprep.subr.mxu0 0.0
    %2298 = vmatpush1.msra.mxu0 0.0
    %2299 = vmatprep.subr.mxu0 0.0
    %2300 = vmatpush1.msra.mxu0 0.0
    %2301 = vmatprep.subr.mxu0 0.0
    %2302 = vmatpush1.msra.mxu0 0.0
    %2303 = vmatprep.subr.mxu0 0.0
    %2304 = vmatpush1.msra.mxu0 0.0
    %2305 = vmatprep.subr.mxu0 0.0
    %2306 = vmatpush1.msra.mxu0 0.0
    %2307 = vmatprep.subr.mxu0 0.0
    %2308 = vmatpush1.msra.mxu0 0.0
    %2309 = vmatprep.subr.mxu0 0.0
    %2310 = vmatpush1.msra.mxu0 0.0
    %2311 = vmatprep.mubr.f32.mxu0 0.0
    %2312 = vmatmul.mubr.f32.gmra.mrb[0].mxu0 %v2245
    %v2313 = vpop.f32.mrb[0].mxu0
    %v2314 = vadd.f32 0.0, %v2313
    %v2315 = vpop.f32.mrb[0].mxu0
    %2316 = vdwg.mxu0
    %v2318 = vsel %vm1164, %v1876, 0
    %2320 = vmatprep.subr.mxu0 0.0
    %2321 = vmatpush1.msra.mxu0 %v1162
    %2322 = vmatprep.subr.mxu0 0.0
    %2323 = vmatpush1.msra.mxu0 0.0
    %2324 = vmatprep.subr.mxu0 0.0
    %2325 = vmatpush1.msra.mxu0 0.0
    %2326 = vmatprep.subr.mxu0 0.0
    %2327 = vmatpush1.msra.mxu0 0.0
    %2328 = vmatprep.subr.mxu0 0.0
    %2329 = vmatpush1.msra.mxu0 0.0
    %2330 = vmatprep.subr.mxu0 0.0
    %2331 = vmatpush1.msra.mxu0 0.0
    %2332 = vmatprep.subr.mxu0 0.0
    %2333 = vmatpush1.msra.mxu0 0.0
    %2334 = vmatprep.subr.mxu0 0.0
    %2335 = vmatpush1.msra.mxu0 0.0
    %2336 = vmatprep.subr.mxu0 0.0
    %2337 = vmatpush1.msra.mxu0 0.0
    %2338 = vmatprep.subr.mxu0 0.0
    %2339 = vmatpush1.msra.mxu0 0.0
    %2340 = vmatprep.subr.mxu0 0.0
    %2341 = vmatpush1.msra.mxu0 0.0
    %2342 = vmatprep.subr.mxu0 0.0
    %2343 = vmatpush1.msra.mxu0 0.0
    %2344 = vmatprep.subr.mxu0 0.0
    %2345 = vmatpush1.msra.mxu0 0.0
    %2346 = vmatprep.subr.mxu0 0.0
    %2347 = vmatpush1.msra.mxu0 0.0
    %2348 = vmatprep.subr.mxu0 0.0
    %2349 = vmatpush1.msra.mxu0 0.0
    %2350 = vmatprep.subr.mxu0 0.0
    %2351 = vmatpush1.msra.mxu0 0.0
    %2352 = vmatprep.subr.mxu0 0.0
    %2353 = vmatpush1.msra.mxu0 0.0
    %2354 = vmatprep.subr.mxu0 0.0
    %2355 = vmatpush1.msra.mxu0 0.0
    %2356 = vmatprep.subr.mxu0 0.0
    %2357 = vmatpush1.msra.mxu0 0.0
    %2358 = vmatprep.subr.mxu0 0.0
    %2359 = vmatpush1.msra.mxu0 0.0
    %2360 = vmatprep.subr.mxu0 0.0
    %2361 = vmatpush1.msra.mxu0 0.0
    %2362 = vmatprep.subr.mxu0 0.0
    %2363 = vmatpush1.msra.mxu0 0.0
    %2364 = vmatprep.subr.mxu0 0.0
    %2365 = vmatpush1.msra.mxu0 0.0
    %2366 = vmatprep.subr.mxu0 0.0
    %2367 = vmatpush1.msra.mxu0 0.0
    %2368 = vmatprep.subr.mxu0 0.0
    %2369 = vmatpush1.msra.mxu0 0.0
    %2370 = vmatprep.subr.mxu0 0.0
    %2371 = vmatpush1.msra.mxu0 0.0
    %2372 = vmatprep.subr.mxu0 0.0
    %2373 = vmatpush1.msra.mxu0 0.0
    %2374 = vmatprep.subr.mxu0 0.0
    %2375 = vmatpush1.msra.mxu0 0.0
    %2376 = vmatprep.subr.mxu0 0.0
    %2377 = vmatpush1.msra.mxu0 0.0
    %2378 = vmatprep.subr.mxu0 0.0
    %2379 = vmatpush1.msra.mxu0 0.0
    %2380 = vmatprep.subr.mxu0 0.0
    %2381 = vmatpush1.msra.mxu0 0.0
    %2382 = vmatprep.subr.mxu0 0.0
    %2383 = vmatpush1.msra.mxu0 0.0
    %2384 = vmatprep.mubr.f32.mxu0 0.0
    %2385 = vmatmul.mubr.f32.gmra.mrb[0].mxu0 %v2318
    %v2386 = vpop.f32.mrb[0].mxu0
    %v2387 = vadd.f32 0.0, %v2386
    %v2388 = vpop.f32.mrb[0].mxu0
    %2389 = vdwg.mxu0
    %v2391 = vsel %vm1164, %v1878, 0
    %2393 = vmatprep.subr.mxu0 0.0
    %2394 = vmatpush1.msra.mxu0 %v1163
    %2395 = vmatprep.subr.mxu0 0.0
    %2396 = vmatpush1.msra.mxu0 0.0
    %2397 = vmatprep.subr.mxu0 0.0
    %2398 = vmatpush1.msra.mxu0 0.0
    %2399 = vmatprep.subr.mxu0 0.0
    %2400 = vmatpush1.msra.mxu0 0.0
    %2401 = vmatprep.subr.mxu0 0.0
    %2402 = vmatpush1.msra.mxu0 0.0
    %2403 = vmatprep.subr.mxu0 0.0
    %2404 = vmatpush1.msra.mxu0 0.0
    %2405 = vmatprep.subr.mxu0 0.0
    %2406 = vmatpush1.msra.mxu0 0.0
    %2407 = vmatprep.subr.mxu0 0.0
    %2408 = vmatpush1.msra.mxu0 0.0
    %2409 = vmatprep.subr.mxu0 0.0
    %2410 = vmatpush1.msra.mxu0 0.0
    %2411 = vmatprep.subr.mxu0 0.0
    %2412 = vmatpush1.msra.mxu0 0.0
    %2413 = vmatprep.subr.mxu0 0.0
    %2414 = vmatpush1.msra.mxu0 0.0
    %2415 = vmatprep.subr.mxu0 0.0
    %2416 = vmatpush1.msra.mxu0 0.0
    %2417 = vmatprep.subr.mxu0 0.0
    %2418 = vmatpush1.msra.mxu0 0.0
    %2419 = vmatprep.subr.mxu0 0.0
    %2420 = vmatpush1.msra.mxu0 0.0
    %2421 = vmatprep.subr.mxu0 0.0
    %2422 = vmatpush1.msra.mxu0 0.0
    %2423 = vmatprep.subr.mxu0 0.0
    %2424 = vmatpush1.msra.mxu0 0.0
    %2425 = vmatprep.subr.mxu0 0.0
    %2426 = vmatpush1.msra.mxu0 0.0
    %2427 = vmatprep.subr.mxu0 0.0
    %2428 = vmatpush1.msra.mxu0 0.0
    %2429 = vmatprep.subr.mxu0 0.0
    %2430 = vmatpush1.msra.mxu0 0.0
    %2431 = vmatprep.subr.mxu0 0.0
    %2432 = vmatpush1.msra.mxu0 0.0
    %2433 = vmatprep.subr.mxu0 0.0
    %2434 = vmatpush1.msra.mxu0 0.0
    %2435 = vmatprep.subr.mxu0 0.0
    %2436 = vmatpush1.msra.mxu0 0.0
    %2437 = vmatprep.subr.mxu0 0.0
    %2438 = vmatpush1.msra.mxu0 0.0
    %2439 = vmatprep.subr.mxu0 0.0
    %2440 = vmatpush1.msra.mxu0 0.0
    %2441 = vmatprep.subr.mxu0 0.0
    %2442 = vmatpush1.msra.mxu0 0.0
    %2443 = vmatprep.subr.mxu0 0.0
    %2444 = vmatpush1.msra.mxu0 0.0
    %2445 = vmatprep.subr.mxu0 0.0
    %2446 = vmatpush1.msra.mxu0 0.0
    %2447 = vmatprep.subr.mxu0 0.0
    %2448 = vmatpush1.msra.mxu0 0.0
    %2449 = vmatprep.subr.mxu0 0.0
    %2450 = vmatpush1.msra.mxu0 0.0
    %2451 = vmatprep.subr.mxu0 0.0
    %2452 = vmatpush1.msra.mxu0 0.0
    %2453 = vmatprep.subr.mxu0 0.0
    %2454 = vmatpush1.msra.mxu0 0.0
    %2455 = vmatprep.subr.mxu0 0.0
    %2456 = vmatpush1.msra.mxu0 0.0
    %2457 = vmatprep.mubr.f32.mxu0 0.0
    %2458 = vmatmul.mubr.f32.gmra.mrb[0].mxu0 %v2391
    %v2459 = vpop.f32.mrb[0].mxu0
    %v2460 = vadd.f32 0.0, %v2459
    %v2461 = vpop.f32.mrb[0].mxu0
    %2462 = vdwg.mxu0
    %v2463 = vcombine.low %v1949, %v2095
    %v2464 = vcombine.high %v1949, %v2095
    %v2466 = vunpack.c.l.s4 1983009808
    %v2467 = vunpack.c.0.s8 %v2466
    %v2468 = vlaneseq
    %v2469 = vshrl.u32 %v2468, 7
    %v2470 = vsub.s32 %v2467, %v2469
    %v2471 = vrot.slane %v2463, %v2470
    %v2473 = vunpack.c.l.s4 1983009808
    %v2474 = vunpack.c.0.s8 %v2473
    %v2475 = vlaneseq
    %v2476 = vshrl.u32 %v2475, 7
    %v2477 = vsub.s32 %v2474, %v2476
    %v2478 = vrot.slane %v2464, %v2477
    %v2479 = vcombine.low %v2022, %v2168
    %v2480 = vcombine.high %v2022, %v2168
    %v2482 = vunpack.c.l.s4 1983009808
    %v2483 = vunpack.c.0.s8 %v2482
    %v2484 = vlaneseq
    %v2485 = vshrl.u32 %v2484, 7
    %v2486 = vsub.s32 %v2483, %v2485
    %v2487 = vrot.slane %v2479, %v2486
    %v2489 = vunpack.c.l.s4 1983009808
    %v2490 = vunpack.c.0.s8 %v2489
    %v2491 = vlaneseq
    %v2492 = vshrl.u32 %v2491, 7
    %v2493 = vsub.s32 %v2490, %v2492
    %v2494 = vrot.slane %v2480, %v2493
    %v2495 = vcombine.low %v2471, %v2487
    %v2496 = vcombine.high %v2471, %v2487
    %v2498 = vunpack.c.l.s4 1934713408
    %v2499 = vunpack.c.0.s8 %v2498
    %v2500 = vlaneseq
    %v2501 = vshrl.u32 %v2500, 7
    %v2502 = vsub.s32 %v2499, %v2501
    %v2503 = vrot.slane %v2495, %v2502
    %v2505 = vunpack.c.l.s4 1934713408
    %v2506 = vunpack.c.0.s8 %v2505
    %v2507 = vlaneseq
    %v2508 = vshrl.u32 %v2507, 7
    %v2509 = vsub.s32 %v2506, %v2508
    %v2510 = vrot.slane %v2496, %v2509
    %v2511 = vcombine.low %v2478, %v2494
    %v2512 = vcombine.high %v2478, %v2494
    %v2514 = vunpack.c.l.s4 1934713408
    %v2515 = vunpack.c.0.s8 %v2514
    %v2516 = vlaneseq
    %v2517 = vshrl.u32 %v2516, 7
    %v2518 = vsub.s32 %v2515, %v2517
    %v2519 = vrot.slane %v2511, %v2518
    %v2521 = vunpack.c.l.s4 1934713408
    %v2522 = vunpack.c.0.s8 %v2521
    %v2523 = vlaneseq
    %v2524 = vshrl.u32 %v2523, 7
    %v2525 = vsub.s32 %v2522, %v2524
    %v2526 = vrot.slane %v2512, %v2525
    %v2527 = vcombine.high %v2503, 0.0
    %v2528 = vcombine.high %v2510, 0.0
    %v2529 = vcombine.high %v2519, 0.0
    %v2530 = vcombine.high %v2526, 0.0
    %v2531 = vcombine.low %v2241, %v2387
    %v2532 = vcombine.high %v2241, %v2387
    %v2534 = vunpack.c.l.s4 1983009808
    %v2535 = vunpack.c.0.s8 %v2534
    %v2536 = vlaneseq
    %v2537 = vshrl.u32 %v2536, 7
    %v2538 = vsub.s32 %v2535, %v2537
    %v2539 = vrot.slane %v2531, %v2538
    %v2541 = vunpack.c.l.s4 1983009808
    %v2542 = vunpack.c.0.s8 %v2541
    %v2543 = vlaneseq
    %v2544 = vshrl.u32 %v2543, 7
    %v2545 = vsub.s32 %v2542, %v2544
    %v2546 = vrot.slane %v2532, %v2545
    %v2547 = vcombine.low %v2314, %v2460
    %v2548 = vcombine.high %v2314, %v2460
    %v2550 = vunpack.c.l.s4 1983009808
    %v2551 = vunpack.c.0.s8 %v2550
    %v2552 = vlaneseq
    %v2553 = vshrl.u32 %v2552, 7
    %v2554 = vsub.s32 %v2551, %v2553
    %v2555 = vrot.slane %v2547, %v2554
    %v2557 = vunpack.c.l.s4 1983009808
    %v2558 = vunpack.c.0.s8 %v2557
    %v2559 = vlaneseq
    %v2560 = vshrl.u32 %v2559, 7
    %v2561 = vsub.s32 %v2558, %v2560
    %v2562 = vrot.slane %v2548, %v2561
    %v2563 = vcombine.low %v2539, %v2555
    %v2564 = vcombine.high %v2539, %v2555
    %v2566 = vunpack.c.l.s4 1934713408
    %v2567 = vunpack.c.0.s8 %v2566
    %v2568 = vlaneseq
    %v2569 = vshrl.u32 %v2568, 7
    %v2570 = vsub.s32 %v2567, %v2569
    %v2571 = vrot.slane %v2563, %v2570
    %v2573 = vunpack.c.l.s4 1934713408
    %v2574 = vunpack.c.0.s8 %v2573
    %v2575 = vlaneseq
    %v2576 = vshrl.u32 %v2575, 7
    %v2577 = vsub.s32 %v2574, %v2576
    %v2578 = vrot.slane %v2564, %v2577
    %v2579 = vcombine.low %v2546, %v2562
    %v2580 = vcombine.high %v2546, %v2562
    %v2582 = vunpack.c.l.s4 1934713408
    %v2583 = vunpack.c.0.s8 %v2582
    %v2584 = vlaneseq
    %v2585 = vshrl.u32 %v2584, 7
    %v2586 = vsub.s32 %v2583, %v2585
    %v2587 = vrot.slane %v2579, %v2586
    %v2589 = vunpack.c.l.s4 1934713408
    %v2590 = vunpack.c.0.s8 %v2589
    %v2591 = vlaneseq
    %v2592 = vshrl.u32 %v2591, 7
    %v2593 = vsub.s32 %v2590, %v2592
    %v2594 = vrot.slane %v2580, %v2593
    %v2595 = vcombine.high %v2571, 0.0
    %v2596 = vcombine.high %v2578, 0.0
    %v2597 = vcombine.high %v2587, 0.0
    %v2598 = vcombine.high %v2594, 0.0
    %v2599 = vcombine.low %v2503, %v2510
    %v2601 = vunpack.c.l.s4 1983009808
    %v2602 = vunpack.c.0.s8 %v2601
    %v2603 = vlaneseq
    %v2604 = vshrl.u32 %v2603, 7
    %v2605 = vsub.s32 %v2602, %v2604
    %v2606 = vrot.slane %v2599, %v2605
    %v2607 = vcombine.low %v2527, %v2528
    %v2609 = vunpack.c.l.s4 1983009808
    %v2610 = vunpack.c.0.s8 %v2609
    %v2611 = vlaneseq
    %v2612 = vshrl.u32 %v2611, 7
    %v2613 = vsub.s32 %v2610, %v2612
    %v2614 = vrot.slane %v2607, %v2613
    %v2615 = vcombine.low %v2519, %v2526
    %v2617 = vunpack.c.l.s4 1983009808
    %v2618 = vunpack.c.0.s8 %v2617
    %v2619 = vlaneseq
    %v2620 = vshrl.u32 %v2619, 7
    %v2621 = vsub.s32 %v2618, %v2620
    %v2622 = vrot.slane %v2615, %v2621
    %v2623 = vcombine.low %v2529, %v2530
    %v2625 = vunpack.c.l.s4 1983009808
    %v2626 = vunpack.c.0.s8 %v2625
    %v2627 = vlaneseq
    %v2628 = vshrl.u32 %v2627, 7
    %v2629 = vsub.s32 %v2626, %v2628
    %v2630 = vrot.slane %v2623, %v2629
    %v2631 = vcombine.low %v2606, %v2614
    %v2632 = vcombine.high %v2606, %v2614
    %v2634 = vunpack.c.l.s4 1934713408
    %v2635 = vunpack.c.0.s8 %v2634
    %v2636 = vlaneseq
    %v2637 = vshrl.u32 %v2636, 7
    %v2638 = vsub.s32 %v2635, %v2637
    %v2639 = vrot.slane %v2631, %v2638
    %v2641 = vunpack.c.l.s4 1934713408
    %v2642 = vunpack.c.0.s8 %v2641
    %v2643 = vlaneseq
    %v2644 = vshrl.u32 %v2643, 7
    %v2645 = vsub.s32 %v2642, %v2644
    %v2646 = vrot.slane %v2632, %v2645
    %v2647 = vcombine.low %v2622, %v2630
    %v2648 = vcombine.high %v2622, %v2630
    %v2650 = vunpack.c.l.s4 1934713408
    %v2651 = vunpack.c.0.s8 %v2650
    %v2652 = vlaneseq
    %v2653 = vshrl.u32 %v2652, 7
    %v2654 = vsub.s32 %v2651, %v2653
    %v2655 = vrot.slane %v2647, %v2654
    %v2657 = vunpack.c.l.s4 1934713408
    %v2658 = vunpack.c.0.s8 %v2657
    %v2659 = vlaneseq
    %v2660 = vshrl.u32 %v2659, 7
    %v2661 = vsub.s32 %v2658, %v2660
    %v2662 = vrot.slane %v2648, %v2661
    %v2663 = vcombine.low %v2639, %v2655
    %v2664 = vcombine.high %v2639, %v2655
    %v2665 = vcombine.low %v2646, %v2662
    %v2666 = vcombine.high %v2646, %v2662
    %v2667 = vcombine.low %v2571, %v2578
    %v2669 = vunpack.c.l.s4 1983009808
    %v2670 = vunpack.c.0.s8 %v2669
    %v2671 = vlaneseq
    %v2672 = vshrl.u32 %v2671, 7
    %v2673 = vsub.s32 %v2670, %v2672
    %v2674 = vrot.slane %v2667, %v2673
    %v2675 = vcombine.low %v2595, %v2596
    %v2677 = vunpack.c.l.s4 1983009808
    %v2678 = vunpack.c.0.s8 %v2677
    %v2679 = vlaneseq
    %v2680 = vshrl.u32 %v2679, 7
    %v2681 = vsub.s32 %v2678, %v2680
    %v2682 = vrot.slane %v2675, %v2681
    %v2683 = vcombine.low %v2587, %v2594
    %v2685 = vunpack.c.l.s4 1983009808
    %v2686 = vunpack.c.0.s8 %v2685
    %v2687 = vlaneseq
    %v2688 = vshrl.u32 %v2687, 7
    %v2689 = vsub.s32 %v2686, %v2688
    %v2690 = vrot.slane %v2683, %v2689
    %v2691 = vcombine.low %v2597, %v2598
    %v2693 = vunpack.c.l.s4 1983009808
    %v2694 = vunpack.c.0.s8 %v2693
    %v2695 = vlaneseq
    %v2696 = vshrl.u32 %v2695, 7
    %v2697 = vsub.s32 %v2694, %v2696
    %v2698 = vrot.slane %v2691, %v2697
    %v2699 = vcombine.low %v2674, %v2682
    %v2700 = vcombine.high %v2674, %v2682
    %v2702 = vunpack.c.l.s4 1934713408
    %v2703 = vunpack.c.0.s8 %v2702
    %v2704 = vlaneseq
    %v2705 = vshrl.u32 %v2704, 7
    %v2706 = vsub.s32 %v2703, %v2705
    %v2707 = vrot.slane %v2699, %v2706
    %v2709 = vunpack.c.l.s4 1934713408
    %v2710 = vunpack.c.0.s8 %v2709
    %v2711 = vlaneseq
    %v2712 = vshrl.u32 %v2711, 7
    %v2713 = vsub.s32 %v2710, %v2712
    %v2714 = vrot.slane %v2700, %v2713
    %v2715 = vcombine.low %v2690, %v2698
    %v2716 = vcombine.high %v2690, %v2698
    %v2718 = vunpack.c.l.s4 1934713408
    %v2719 = vunpack.c.0.s8 %v2718
    %v2720 = vlaneseq
    %v2721 = vshrl.u32 %v2720, 7
    %v2722 = vsub.s32 %v2719, %v2721
    %v2723 = vrot.slane %v2715, %v2722
    %v2725 = vunpack.c.l.s4 1934713408
    %v2726 = vunpack.c.0.s8 %v2725
    %v2727 = vlaneseq
    %v2728 = vshrl.u32 %v2727, 7
    %v2729 = vsub.s32 %v2726, %v2728
    %v2730 = vrot.slane %v2716, %v2729
    %v2731 = vcombine.low %v2707, %v2723
    %v2732 = vcombine.high %v2707, %v2723
    %v2733 = vcombine.low %v2714, %v2730
    %v2734 = vcombine.high %v2714, %v2730
    %2737 = vrot.lane.b32.xlu0 %v2664, 8
    %v2738 = vpop.permute.xlu0 %2737
    %2739 = vrot.lane.b32.xlu0 %v2732, 8
    %v2740 = vpop.permute.xlu0 %2739
    %2745 = vrot.lane.b32.xlu0 %v2665, 16
    %v2746 = vpop.permute.xlu0 %2745
    %2747 = vrot.lane.b32.xlu0 %v2733, 16
    %v2748 = vpop.permute.xlu0 %2747
    %2753 = vrot.lane.b32.xlu0 %v2666, 24
    %v2754 = vpop.permute.xlu0 %2753
    %2755 = vrot.lane.b32.xlu0 %v2734, 24
    %v2756 = vpop.permute.xlu0 %2755
    %v2759 = vsel %vm1164, %v2663, %v2738
    %v2760 = vsel %vm1164, %v2731, %v2740
    %vm2761 = vcmask 130048
    %v2762 = vsel %vm2761, %v2759, %v2746
    %v2763 = vsel %vm2761, %v2760, %v2748
    %vm2764 = vcmask 195584
    %v2765 = vsel %vm2764, %v2762, %v2754
    %v2766 = vsel %vm2764, %v2763, %v2756
    %v2767 = vld [vmem:[#allocation7] sm:$0xff]
    %v2768 = vld [vmem:[#allocation7 + $0x8] sm:$0xff]
    %v2769 = vld [vmem:[#allocation7 + $0x10] sm:$0xff]
    %v2770 = vld [vmem:[#allocation7 + $0x18] sm:$0xff]
    %v2771 = vlaneseq
    %v2772 = vshrl.u32 %v2771, 7
    %v2773 = vsub.s32 0, %v2772
    %v2774 = vrot.slane %v92, %v2773
    %v2776 = vsel %vm111, %v2765, 0
    %v2779 = vsel %vm111, %v2766, 0
    %2781 = vmatprep.subr.mxu0 0.0
    %2782 = vmatpush1.msra.mxu0 %v2767
    %2783 = vmatprep.subr.mxu0 0.0
    %2784 = vmatpush1.msra.mxu0 %v2768
    %2785 = vmatprep.subr.mxu0 0.0
    %2786 = vmatpush1.msra.mxu0 %v2769
    %2787 = vmatprep.subr.mxu0 0.0
    %2788 = vmatpush1.msra.mxu0 %v2770
    %2789 = vmatprep.subr.mxu0 0.0
    %2790 = vmatpush1.msra.mxu0 0.0
    %2791 = vmatprep.subr.mxu0 0.0
    %2792 = vmatpush1.msra.mxu0 0.0
    %2793 = vmatprep.subr.mxu0 0.0
    %2794 = vmatpush1.msra.mxu0 0.0
    %2795 = vmatprep.subr.mxu0 0.0
    %2796 = vmatpush1.msra.mxu0 0.0
    %2797 = vmatprep.subr.mxu0 0.0
    %2798 = vmatpush1.msra.mxu0 0.0
    %2799 = vmatprep.subr.mxu0 0.0
    %2800 = vmatpush1.msra.mxu0 0.0
    %2801 = vmatprep.subr.mxu0 0.0
    %2802 = vmatpush1.msra.mxu0 0.0
    %2803 = vmatprep.subr.mxu0 0.0
    %2804 = vmatpush1.msra.mxu0 0.0
    %2805 = vmatprep.subr.mxu0 0.0
    %2806 = vmatpush1.msra.mxu0 0.0
    %2807 = vmatprep.subr.mxu0 0.0
    %2808 = vmatpush1.msra.mxu0 0.0
    %2809 = vmatprep.subr.mxu0 0.0
    %2810 = vmatpush1.msra.mxu0 0.0
    %2811 = vmatprep.subr.mxu0 0.0
    %2812 = vmatpush1.msra.mxu0 0.0
    %2813 = vmatprep.subr.mxu0 0.0
    %2814 = vmatpush1.msra.mxu0 0.0
    %2815 = vmatprep.subr.mxu0 0.0
    %2816 = vmatpush1.msra.mxu0 0.0
    %2817 = vmatprep.subr.mxu0 0.0
    %2818 = vmatpush1.msra.mxu0 0.0
    %2819 = vmatprep.subr.mxu0 0.0
    %2820 = vmatpush1.msra.mxu0 0.0
    %2821 = vmatprep.subr.mxu0 0.0
    %2822 = vmatpush1.msra.mxu0 0.0
    %2823 = vmatprep.subr.mxu0 0.0
    %2824 = vmatpush1.msra.mxu0 0.0
    %2825 = vmatprep.subr.mxu0 0.0
    %2826 = vmatpush1.msra.mxu0 0.0
    %2827 = vmatprep.subr.mxu0 0.0
    %2828 = vmatpush1.msra.mxu0 0.0
    %2829 = vmatprep.subr.mxu0 0.0
    %2830 = vmatpush1.msra.mxu0 0.0
    %2831 = vmatprep.subr.mxu0 0.0
    %2832 = vmatpush1.msra.mxu0 0.0
    %2833 = vmatprep.subr.mxu0 0.0
    %2834 = vmatpush1.msra.mxu0 0.0
    %2835 = vmatprep.subr.mxu0 0.0
    %2836 = vmatpush1.msra.mxu0 0.0
    %2837 = vmatprep.subr.mxu0 0.0
    %2838 = vmatpush1.msra.mxu0 0.0
    %2839 = vmatprep.subr.mxu0 0.0
    %2840 = vmatpush1.msra.mxu0 0.0
    %2841 = vmatprep.subr.mxu0 0.0
    %2842 = vmatpush1.msra.mxu0 0.0
    %2843 = vmatprep.subr.mxu0 0.0
    %2844 = vmatpush1.msra.mxu0 0.0
    %2845 = vmatprep.mubr.f32.mxu0 0.0
    %2846 = vmatmul.mubr.f32.gmra.mrb[0].mxu0 %v2776
    %v2847 = vpop.f32.mrb[0].mxu0
    %v2848 = vadd.f32 %v2774, %v2847
    %v2849 = vpop.f32.mrb[0].mxu0
    %2850 = vmatprep.mubr.f32.mxu0 0.0
    %2851 = vmatmul.mubr.f32.gmra.mrb[0].mxu0 %v2779
    %v2852 = vpop.f32.mrb[0].mxu0
    %v2853 = vadd.f32 %v2774, %v2852
    %v2854 = vpop.f32.mrb[0].mxu0
    %2855 = vdwg.mxu0
    %v2856 = vadd.f32 %v85, %v2848
    %v2857 = vadd.f32 %v86, %v2853
    %v2858 = vsel %vm111, %v2856, 0.0
    %2859 = vadd.xlane.f32.xlu0 %v2858
    %v2860 = vpop.xlane.xlu0 %2859
    %v2861 = vsel %vm111, %v2857, 0.0
    %2862 = vadd.xlane.f32.xlu0 %v2861
    %v2863 = vpop.xlane.xlu0 %2862
    %v2864 = vrcp.pop 32.0
    %v2865 = vmul.f32 %v2860, %v2864
    %v2866 = vmul.f32 %v2863, %v2864
    %v2867 = vsub.f32 %v2856, %v2865
    %v2868 = vsub.f32 %v2857, %v2866
    %v2869 = vmul.f32 %v2867, %v2867
    %v2870 = vmul.f32 %v2868, %v2868
    %v2871 = vsel %vm111, %v2869, 0.0
    %2872 = vadd.xlane.f32.xlu0 %v2871
    %v2873 = vpop.xlane.xlu0 %2872
    %v2874 = vsel %vm111, %v2870, 0.0
    %2875 = vadd.xlane.f32.xlu0 %v2874
    %v2876 = vpop.xlane.xlu0 %2875
    %v2877 = vmul.f32 %v2873, %v2864
    %v2878 = vmul.f32 %v2876, %v2864
    %v2879 = vadd.f32 %v2877, 1e-05
    %v2880 = vadd.f32 %v2878, 1e-05
    %v2881 = vrsqrt.pop %v2879
    %v2882 = vrsqrt.pop %v2880
    %v2883 = vmul.f32 %v2867, %v2881
    %v2884 = vmul.f32 %v2868, %v2882
    %v2885 = vlaneseq
    %v2886 = vshrl.u32 %v2885, 7
    %v2887 = vsub.s32 0, %v2886
    %v2888 = vrot.slane %v93, %v2887
    %v2889 = vmul.f32 %v2883, %v2888
    %v2890 = vmul.f32 %v2884, %v2888
    %v2891 = vlaneseq
    %v2892 = vshrl.u32 %v2891, 7
    %v2893 = vsub.s32 0, %v2892
    %v2894 = vrot.slane %v94, %v2893
    %v2895 = vadd.f32 %v2889, %v2894
    %v2896 = vadd.f32 %v2890, %v2894
    %v2897 = vld [vmem:[#allocation8] sm:$0xff]
    %v2898 = vld [vmem:[#allocation8 + $0x8] sm:$0xff]
    %v2899 = vld [vmem:[#allocation8 + $0x10] sm:$0xff]
    %v2900 = vld [vmem:[#allocation8 + $0x18] sm:$0xff]
    %v2901 = vlaneseq
    %v2902 = vshrl.u32 %v2901, 7
    %v2903 = vsub.s32 0, %v2902
    %v2904 = vrot.slane %v95, %v2903
    %v2906 = vsel %vm111, %v2895, 0
    %v2909 = vsel %vm111, %v2896, 0
    %2911 = vmatprep.subr.mxu0 0.0
    %2912 = vmatpush1.msra.mxu0 %v2897
    %2913 = vmatprep.subr.mxu0 0.0
    %2914 = vmatpush1.msra.mxu0 %v2898
    %2915 = vmatprep.subr.mxu0 0.0
    %2916 = vmatpush1.msra.mxu0 %v2899
    %2917 = vmatprep.subr.mxu0 0.0
    %2918 = vmatpush1.msra.mxu0 %v2900
    %2919 = vmatprep.subr.mxu0 0.0
    %2920 = vmatpush1.msra.mxu0 0.0
    %2921 = vmatprep.subr.mxu0 0.0
    %2922 = vmatpush1.msra.mxu0 0.0
    %2923 = vmatprep.subr.mxu0 0.0
    %2924 = vmatpush1.msra.mxu0 0.0
    %2925 = vmatprep.subr.mxu0 0.0
    %2926 = vmatpush1.msra.mxu0 0.0
    %2927 = vmatprep.subr.mxu0 0.0
    %2928 = vmatpush1.msra.mxu0 0.0
    %2929 = vmatprep.subr.mxu0 0.0
    %2930 = vmatpush1.msra.mxu0 0.0
    %2931 = vmatprep.subr.mxu0 0.0
    %2932 = vmatpush1.msra.mxu0 0.0
    %2933 = vmatprep.subr.mxu0 0.0
    %2934 = vmatpush1.msra.mxu0 0.0
    %2935 = vmatprep.subr.mxu0 0.0
    %2936 = vmatpush1.msra.mxu0 0.0
    %2937 = vmatprep.subr.mxu0 0.0
    %2938 = vmatpush1.msra.mxu0 0.0
    %2939 = vmatprep.subr.mxu0 0.0
    %2940 = vmatpush1.msra.mxu0 0.0
    %2941 = vmatprep.subr.mxu0 0.0
    %2942 = vmatpush1.msra.mxu0 0.0
    %2943 = vmatprep.subr.mxu0 0.0
    %2944 = vmatpush1.msra.mxu0 0.0
    %2945 = vmatprep.subr.mxu0 0.0
    %2946 = vmatpush1.msra.mxu0 0.0
    %2947 = vmatprep.subr.mxu0 0.0
    %2948 = vmatpush1.msra.mxu0 0.0
    %2949 = vmatprep.subr.mxu0 0.0
    %2950 = vmatpush1.msra.mxu0 0.0
    %2951 = vmatprep.subr.mxu0 0.0
    %2952 = vmatpush1.msra.mxu0 0.0
    %2953 = vmatprep.subr.mxu0 0.0
    %2954 = vmatpush1.msra.mxu0 0.0
    %2955 = vmatprep.subr.mxu0 0.0
    %2956 = vmatpush1.msra.mxu0 0.0
    %2957 = vmatprep.subr.mxu0 0.0
    %2958 = vmatpush1.msra.mxu0 0.0
    %2959 = vmatprep.subr.mxu0 0.0
    %2960 = vmatpush1.msra.mxu0 0.0
    %2961 = vmatprep.subr.mxu0 0.0
    %2962 = vmatpush1.msra.mxu0 0.0
    %2963 = vmatprep.subr.mxu0 0.0
    %2964 = vmatpush1.msra.mxu0 0.0
    %2965 = vmatprep.subr.mxu0 0.0
    %2966 = vmatpush1.msra.mxu0 0.0
    %2967 = vmatprep.subr.mxu0 0.0
    %2968 = vmatpush1.msra.mxu0 0.0
    %2969 = vmatprep.subr.mxu0 0.0
    %2970 = vmatpush1.msra.mxu0 0.0
    %2971 = vmatprep.subr.mxu0 0.0
    %2972 = vmatpush1.msra.mxu0 0.0
    %2973 = vmatprep.subr.mxu0 0.0
    %2974 = vmatpush1.msra.mxu0 0.0
    %2975 = vmatprep.mubr.f32.mxu0 0.0
    %2976 = vmatmul.mubr.f32.gmra.mrb[0].mxu0 %v2906
    %v2977 = vpop.f32.mrb[0].mxu0
    %v2978 = vadd.f32 %v2904, %v2977
    %v2979 = vpop.f32.mrb[0].mxu0
    %2980 = vmatprep.mubr.f32.mxu0 0.0
    %2981 = vmatmul.mubr.f32.gmra.mrb[0].mxu0 %v2909
    %v2982 = vpop.f32.mrb[0].mxu0
    %v2983 = vadd.f32 %v2904, %v2982
    %v2984 = vpop.f32.mrb[0].mxu0
    %2985 = vdwg.mxu0
    %v2986 = vmax.f32 %v2978, 0.0
    %v2987 = vmax.f32 %v2983, 0.0
    %v2988 = vld [vmem:[%s5] sm:$0xff]
    %v2989 = vld [vmem:[%s5 + $0x8] sm:$0xff]
    %v2990 = vld [vmem:[%s5 + $0x10] sm:$0xff]
    %v2991 = vld [vmem:[%s5 + $0x18] sm:$0xff]
    %v2992 = vld [vmem:[%s5 + $0x20] sm:$0xff]
    %v2993 = vld [vmem:[%s5 + $0x28] sm:$0xff]
    %v2994 = vld [vmem:[%s5 + $0x30] sm:$0xff]
    %v2995 = vld [vmem:[%s5 + $0x38] sm:$0xff]
    %v2996 = vlaneseq
    %v2997 = vshrl.u32 %v2996, 7
    %v2998 = vsub.s32 0, %v2997
    %v2999 = vrot.slane %v96, %v2998
    %vm3000 = vcmask 523264
    %v3002 = vsel %vm3000, %v2986, 0
    %v3005 = vsel %vm3000, %v2987, 0
    %3007 = vmatprep.subr.mxu0 0.0
    %3008 = vmatpush1.msra.mxu0 %v2988
    %3009 = vmatprep.subr.mxu0 0.0
    %3010 = vmatpush1.msra.mxu0 %v2989
    %3011 = vmatprep.subr.mxu0 0.0
    %3012 = vmatpush1.msra.mxu0 %v2990
    %3013 = vmatprep.subr.mxu0 0.0
    %3014 = vmatpush1.msra.mxu0 %v2991
    %3015 = vmatprep.subr.mxu0 0.0
    %3016 = vmatpush1.msra.mxu0 %v2992
    %3017 = vmatprep.subr.mxu0 0.0
    %3018 = vmatpush1.msra.mxu0 %v2993
    %3019 = vmatprep.subr.mxu0 0.0
    %3020 = vmatpush1.msra.mxu0 %v2994
    %3021 = vmatprep.subr.mxu0 0.0
    %3022 = vmatpush1.msra.mxu0 %v2995
    %3023 = vmatprep.subr.mxu0 0.0
    %3024 = vmatpush1.msra.mxu0 0.0
    %3025 = vmatprep.subr.mxu0 0.0
    %3026 = vmatpush1.msra.mxu0 0.0
    %3027 = vmatprep.subr.mxu0 0.0
    %3028 = vmatpush1.msra.mxu0 0.0
    %3029 = vmatprep.subr.mxu0 0.0
    %3030 = vmatpush1.msra.mxu0 0.0
    %3031 = vmatprep.subr.mxu0 0.0
    %3032 = vmatpush1.msra.mxu0 0.0
    %3033 = vmatprep.subr.mxu0 0.0
    %3034 = vmatpush1.msra.mxu0 0.0
    %3035 = vmatprep.subr.mxu0 0.0
    %3036 = vmatpush1.msra.mxu0 0.0
    %3037 = vmatprep.subr.mxu0 0.0
    %3038 = vmatpush1.msra.mxu0 0.0
    %3039 = vmatprep.subr.mxu0 0.0
    %3040 = vmatpush1.msra.mxu0 0.0
    %3041 = vmatprep.subr.mxu0 0.0
    %3042 = vmatpush1.msra.mxu0 0.0
    %3043 = vmatprep.subr.mxu0 0.0
    %3044 = vmatpush1.msra.mxu0 0.0
    %3045 = vmatprep.subr.mxu0 0.0
    %3046 = vmatpush1.msra.mxu0 0.0
    %3047 = vmatprep.subr.mxu0 0.0
    %3048 = vmatpush1.msra.mxu0 0.0
    %3049 = vmatprep.subr.mxu0 0.0
    %3050 = vmatpush1.msra.mxu0 0.0
    %3051 = vmatprep.subr.mxu0 0.0
    %3052 = vmatpush1.msra.mxu0 0.0
    %3053 = vmatprep.subr.mxu0 0.0
    %3054 = vmatpush1.msra.mxu0 0.0
    %3055 = vmatprep.subr.mxu0 0.0
    %3056 = vmatpush1.msra.mxu0 0.0
    %3057 = vmatprep.subr.mxu0 0.0
    %3058 = vmatpush1.msra.mxu0 0.0
    %3059 = vmatprep.subr.mxu0 0.0
    %3060 = vmatpush1.msra.mxu0 0.0
    %3061 = vmatprep.subr.mxu0 0.0
    %3062 = vmatpush1.msra.mxu0 0.0
    %3063 = vmatprep.subr.mxu0 0.0
    %3064 = vmatpush1.msra.mxu0 0.0
    %3065 = vmatprep.subr.mxu0 0.0
    %3066 = vmatpush1.msra.mxu0 0.0
    %3067 = vmatprep.subr.mxu0 0.0
    %3068 = vmatpush1.msra.mxu0 0.0
    %3069 = vmatprep.subr.mxu0 0.0
    %3070 = vmatpush1.msra.mxu0 0.0
    %3071 = vmatprep.mubr.f32.mxu0 0.0
    %3072 = vmatmul.mubr.f32.gmra.mrb[0].mxu0 %v3002
    %v3073 = vpop.f32.mrb[0].mxu0
    %v3074 = vadd.f32 %v2999, %v3073
    %v3075 = vpop.f32.mrb[0].mxu0
    %3076 = vmatprep.mubr.f32.mxu0 0.0
    %3077 = vmatmul.mubr.f32.gmra.mrb[0].mxu0 %v3005
    %v3078 = vpop.f32.mrb[0].mxu0
    %v3079 = vadd.f32 %v2999, %v3078
    %v3080 = vpop.f32.mrb[0].mxu0
    %3081 = vdwg.mxu0
    %v3082 = vadd.f32 %v2895, %v3074
    %v3083 = vadd.f32 %v2896, %v3079
    %v3084 = vsel %vm111, %v3082, 0.0
    %3085 = vadd.xlane.f32.xlu0 %v3084
    %v3086 = vpop.xlane.xlu0 %3085
    %v3087 = vsel %vm111, %v3083, 0.0
    %3088 = vadd.xlane.f32.xlu0 %v3087
    %v3089 = vpop.xlane.xlu0 %3088
    %v3090 = vmul.f32 %v3086, %v2864
    %v3091 = vmul.f32 %v3089, %v2864
    %v3092 = vsub.f32 %v3082, %v3090
    %v3093 = vsub.f32 %v3083, %v3091
    %v3094 = vmul.f32 %v3092, %v3092
    %v3095 = vmul.f32 %v3093, %v3093
    %v3096 = vsel %vm111, %v3094, 0.0
    %3097 = vadd.xlane.f32.xlu0 %v3096
    %v3098 = vpop.xlane.xlu0 %3097
    %v3099 = vsel %vm111, %v3095, 0.0
    %3100 = vadd.xlane.f32.xlu0 %v3099
    %v3101 = vpop.xlane.xlu0 %3100
    %v3102 = vmul.f32 %v3098, %v2864
    %v3103 = vmul.f32 %v3101, %v2864
    %v3104 = vadd.f32 %v3102, 1e-05
    %v3105 = vadd.f32 %v3103, 1e-05
    %v3106 = vrsqrt.pop %v3104
    %v3107 = vrsqrt.pop %v3105
    %v3108 = vmul.f32 %v3092, %v3106
    %v3109 = vmul.f32 %v3093, %v3107
    %v3110 = vlaneseq
    %v3111 = vshrl.u32 %v3110, 7
    %v3112 = vsub.s32 0, %v3111
    %v3113 = vrot.slane %v97, %v3112
    %v3114 = vmul.f32 %v3108, %v3113
    %v3115 = vmul.f32 %v3109, %v3113
    %v3116 = vlaneseq
    %v3117 = vshrl.u32 %v3116, 7
    %v3118 = vsub.s32 0, %v3117
    %v3119 = vrot.slane %v98, %v3118
    %v3120 = vadd.f32 %v3114, %v3119
    %v3121 = vadd.f32 %v3115, %v3119
    %3122 = vst.msk [vmem:[#allocation10] sm:$0xff] %vm111, %v3120
    %3123 = vst.msk [vmem:[#allocation10 + $0x8] sm:$0xff] %vm111, %v3121
    %3124 = vst.msk [vmem:[#allocation11] sm:$0xff] %vm1164, %v1864
    %3125 = vst.msk [vmem:[#allocation11 + $0x8] sm:$0xff] %vm1164, %v1866
    %3126 = vst.msk [vmem:[#allocation11 + $0x10] sm:$0xff] %vm1164, %v1868
    %3127 = vst.msk [vmem:[#allocation11 + $0x18] sm:$0xff] %vm1164, %v1870
    %3128 = vst.msk [vmem:[#allocation11 + $0x20] sm:$0xff] %vm1164, %v1872
    %3129 = vst.msk [vmem:[#allocation11 + $0x28] sm:$0xff] %vm1164, %v1874
    %3130 = vst.msk [vmem:[#allocation11 + $0x30] sm:$0xff] %vm1164, %v1876
    %3131 = vst.msk [vmem:[#allocation11 + $0x38] sm:$0xff] %vm1164, %v1878
    // Predicated region
    $region46: #{decoder_layer.1} parent=1 // pred_check
      _
    $region47: #{decoder_layer.1} parent=1 // pred_check_branch
      %3133 = sbr.rel (0) target = $region49
    $region48: #{decoder_layer.1} parent=1 // pred_region
      %s3135 = ssub.s32 256, 256
      %3136 = vsyncadd [#allocation4], %s3135
      %s3137 = sshll.u32 [#allocation10], 4
      %s3138 = int_to_ptr.vmem [resolvable:$true] %s3137
      %3143 = dma.vmem_to_hbm [thread:$0]  %s3138, 256, %s7, [#allocation4], 128, 128, 8
    $region49: #{decoder_layer.1} parent=1 // pred_fallthru
      _
    // Predicated region
    $region50: #{decoder_layer.1} parent=1 // pred_check
      _
    $region51: #{decoder_layer.1} parent=1 // pred_check_branch
      %3145 = sbr.rel (0) target = $region53
    $region52: #{decoder_layer.1} parent=1 // pred_region
      %s3147 = ssub.s32 1024, 1024
      %3148 = vsyncadd [#allocation12], %s3147
      %s3149 = sshll.u32 [#allocation11], 4
      %s3150 = int_to_ptr.vmem [resolvable:$true] %s3149
      %3155 = dma.vmem_to_hbm [thread:$0]  %s3150, 1024, %s8, [#allocation12], 128, 128, 8
    $region53: #{decoder_layer.1} parent=1 // pred_fallthru
      _
    // Predicated region
    $region54: #{decoder_layer.1} parent=1 // pred_check
      _
    $region55: #{decoder_layer.1} parent=1 // pred_check_branch
      %3157 = sbr.rel (0) target = $region57
    $region56: #{decoder_layer.1} parent=1 // pred_region
      %3158 = dma.done [#allocation4], 256
    $region57: #{decoder_layer.1} parent=1 // pred_fallthru
      _
    // Predicated region
    $region58: #{decoder_layer.1} parent=1 // pred_check
      _
    $region59: #{decoder_layer.1} parent=1 // pred_check_branch
      %3160 = sbr.rel (0) target = $region61
    $region60: #{decoder_layer.1} parent=1 // pred_region
      %3161 = dma.done [#allocation12], 1024
    $region61: #{decoder_layer.1} parent=1 // pred_fallthru
      _
    %3162 = vsyncpa [#allocation3], 1
    %3163 = vsyncpa [#allocation6], 1
    %3164 = vsyncpa [#allocation9], 1
    %3165 = vsyncpa [#allocation4], 1
    %3166 = vsyncpa [#allocation12], 1

</llo_original>
